<compile_context>
chip_gen: v5e
topology: v5e:2x2
jax: 0.10.0
libtpu: 0.0.40
codegen_flags: <defaults>
</compile_context>

<pallas_src>
import jax
import jax.numpy as jnp
from jax.experimental import pallas as pl
from jax.experimental.pallas import tpu as pltpu


def _sine_layer_kernel(x_ref, wt_ref, b_ref, o_ref):
    # x_ref : (tm, in_features)   caller dtype (cast to bf16 here for the MXU)
    # wt_ref: (in_features, out_features)  bf16, omega_0 already folded in
    # b_ref : (1, out_features)            f32,  omega_0 already folded in
    xb = x_ref[...].astype(jnp.bfloat16)
    z = jnp.dot(xb, wt_ref[...], preferred_element_type=jnp.float32)
    o_ref[...] = jnp.sin(z + b_ref[...]).astype(o_ref.dtype)


def _round_up(x, m):
    return ((x + m - 1) // m) * m


def sine_layer(x, weight, bias=None, *, omega_0=30.0, block_rows=1024,
               vmem_budget_bytes=32 * 1024 * 1024):
    """SineLayer forward: sin(omega_0 * (x @ W^T + b)).

    x:      (..., in_features)            any float dtype (output matches it)
    weight: (out_features, in_features)   PyTorch nn.Linear layout
    bias:   (out_features,) or None
    """
    out_features, in_features = weight.shape
    lead_shape = x.shape[:-1]
    out_dtype = x.dtype

    # Flatten leading dims only -- keep the caller's dtype, no extra HBM cast pass.
    x2 = x.reshape(-1, in_features)
    M = x2.shape[0]

    # Fold omega_0 into the (tiny) parameters; pre-transpose the weight into the
    # MXU-preferred (K, N) layout and cast it to bf16 once.
    # (In a real model, store the weight pre-transposed / pre-scaled at init time.)
    wt = (weight.T * omega_0).astype(jnp.bfloat16)                    # (in, out)
    if bias is None:
        b2 = jnp.zeros((1, out_features), jnp.float32)
    else:
        b2 = (bias * omega_0).astype(jnp.float32).reshape(1, out_features)

    # ---- Row-tile selection from a VMEM budget -----------------------------
    x_bytes = x2.dtype.itemsize
    o_bytes = jnp.dtype(out_dtype).itemsize
    # Double-buffered x and out tiles per row; weight/bias resident (count them
    # double-buffered to stay conservative about Pallas' default pipelining).
    per_row_bytes = 2 * (in_features * x_bytes + out_features * o_bytes)
    fixed_bytes = 2 * (in_features * out_features * 2 + out_features * 4)

    if M <= 8:
        tm = M                                   # block == full array dim
    else:
        budget_rows = max(8, (vmem_budget_bytes - fixed_bytes) // per_row_bytes)
        tm = min(block_rows, budget_rows, _round_up(M, 8))
        tm = max(8, (tm // 8) * 8)               # sublane multiple
        # Guarantee >= 2 grid steps so the "parallel" axis can shard across both
        # v7x TensorCores even for small/medium M.
        if pl.cdiv(M, tm) < 2:
            tm = max(8, _round_up(pl.cdiv(M, 2), 8))

    grid = (pl.cdiv(M, tm),)   # ragged last block: reads padded, stores masked

    # TODO(synk): for very wide layers (out_features in the multi-thousands) add a
    # second "parallel" grid axis over out_features (tn a multiple of 128) instead
    # of keeping the full weight / output row-block resident in VMEM.
    out = pl.pallas_call(
        _sine_layer_kernel,
        out_shape=jax.ShapeDtypeStruct((M, out_features), out_dtype),
        grid_spec=pltpu.PrefetchScalarGridSpec(
            num_scalar_prefetch=0,
            grid=grid,
            in_specs=[
                pl.BlockSpec((tm, in_features), lambda i: (i, 0)),
                # Grid-invariant weight / bias blocks: DMA'd once, reused each step.
                # (Could be single-buffered via pipeline_mode to save their second
                #  VMEM buffer; negligible here since weight+bias are tiny.)
                pl.BlockSpec((in_features, out_features), lambda i: (0, 0)),
                pl.BlockSpec((1, out_features), lambda i: (0, 0)),
            ],
            out_specs=pl.BlockSpec((tm, out_features), lambda i: (i, 0)),
        ),
        compiler_params=pltpu.CompilerParams(
            dimension_semantics=("parallel",),
            # Raise the scoped-VMEM limit above the tile budget (v5e default is
            # only 16 MiB) while staying well inside v7x's 64 MiB physical VMEM.
            vmem_limit_bytes=min(vmem_budget_bytes + (16 << 20), 56 << 20),
        ),
    )(x2, wt, b2)

    return out.reshape(*lead_shape, out_features)


def sine_layer_reference(x, weight, bias=None, *, omega_0=30.0):
    """Pure-JAX transcription of the PyTorch forward, for verification."""
    z = x @ weight.T
    if bias is not None:
        z = z + bias
    return jnp.sin(omega_0 * z)


if __name__ == "__main__":
    B, N, IN_F, OUT_F = 2, 128, 64, 128
    OMEGA = 30.0

    key = jax.random.PRNGKey(0)
    kx, kw, kb = jax.random.split(key, 3)

    x = jax.random.normal(kx, (B, N, IN_F), dtype=jnp.float32)

    # SIREN (is_first=False) init: U(-sqrt(6/in)/omega, +sqrt(6/in)/omega);
    # bias: PyTorch Linear default U(-1/sqrt(in), +1/sqrt(in)).
    w_bound = (6.0 / IN_F) ** 0.5 / OMEGA
    b_bound = 1.0 / (IN_F ** 0.5)
    weight = jax.random.uniform(kw, (OUT_F, IN_F), jnp.float32, -w_bound, w_bound)
    bias = jax.random.uniform(kb, (OUT_F,), jnp.float32, -b_bound, b_bound)

    out = sine_layer(x, weight, bias, omega_0=OMEGA)
    out = jax.block_until_ready(out)

    ref = sine_layer_reference(x, weight, bias, omega_0=OMEGA)
    max_diff = float(jnp.max(jnp.abs(out - ref)))

    assert out.shape == (B, N, OUT_F), out.shape
    assert out.dtype == x.dtype, out.dtype
    # bf16 MXU path vs. f32 reference: expect ~1e-2 worst-case deviation.
    assert max_diff < 5e-2, f"mismatch vs reference: {max_diff}"

    print("KERNEL_OK")
</pallas_src>

<mosaic_0001>
module attributes {stable_mosaic.version = 11 : i64} {
  func.func @_sine_layer_kernel(%arg0: i32, %arg1: memref<128x64xf32, #tpu.memory_space<vmem>>, %arg2: memref<64x128xbf16, #tpu.memory_space<vmem>>, %arg3: memref<1x128xf32, #tpu.memory_space<vmem>>, %arg4: memref<128x128xf32, #tpu.memory_space<vmem>>) attributes {dimension_semantics = [#tpu.dimension_semantics<parallel>], iteration_bounds = array<i64: 2>, scalar_prefetch = 0 : i64, scratch_operands = 0 : i64, tpu.core_type = #tpu.core_type<tc>, window_params = [{transform_indices = @transform_0, window_bounds = array<i64: 128, 64>}, {pipeline_mode = #tpu.pipeline_mode<synchronous>, transform_indices = @transform_1, window_bounds = array<i64: 64, 128>}, {pipeline_mode = #tpu.pipeline_mode<synchronous>, transform_indices = @transform_2, window_bounds = array<i64: 1, 128>}, {transform_indices = @transform_3, window_bounds = array<i64: 128, 128>}]} {
    %c0 = arith.constant 0 : index
    %c0_0 = arith.constant 0 : index
    %0 = vector.load %arg1[%c0, %c0_0] : memref<128x64xf32, #tpu.memory_space<vmem>>, vector<128x64xf32>
    %1 = arith.truncf %0 : vector<128x64xf32> to vector<128x64xbf16>
    %c0_1 = arith.constant 0 : index
    %c0_2 = arith.constant 0 : index
    %2 = vector.load %arg2[%c0_1, %c0_2] : memref<64x128xbf16, #tpu.memory_space<vmem>>, vector<64x128xbf16>
    %cst = arith.constant dense<0.000000e+00> : vector<128x128xf32>
    %3 = tpu.matmul %1, %2, %cst {dimension_numbers = #tpu.dot_dimension_numbers<[1], [0], [0], [1], [0, 0, 1, 1], [], []>} : vector<128x64xbf16>, vector<64x128xbf16>, vector<128x128xf32> -> vector<128x128xf32>
    %c0_3 = arith.constant 0 : index
    %c0_4 = arith.constant 0 : index
    %4 = vector.load %arg3[%c0_3, %c0_4] : memref<1x128xf32, #tpu.memory_space<vmem>>, vector<1x128xf32>
    %5 = vector.broadcast %4 : vector<1x128xf32> to vector<128x128xf32>
    %6 = arith.addf %3, %5 : vector<128x128xf32>
    %7 = math.sin %6 : vector<128x128xf32>
    %c0_5 = arith.constant 0 : index
    %c0_6 = arith.constant 0 : index
    %8 = vector.load %arg4[%c0_5, %c0_6] : memref<128x128xf32, #tpu.memory_space<vmem>>, vector<128x128xf32>
    tpu.vector_store %arg4[%c0_5, %c0_6], %7 {strides = array<i32>} : memref<128x128xf32, #tpu.memory_space<vmem>>, vector<128x128xf32>,
    return
  }
  func.func @transform_0(%arg0: i32) -> (i32, i32) {
    %c0_i32 = arith.constant 0 : i32
    %c0_i32_0 = arith.constant 0 : i32
    return %arg0, %c0_i32 : i32, i32
  }
  func.func @transform_1(%arg0: i32) -> (i32, i32) {
    %c0_i32 = arith.constant 0 : i32
    %c0_i32_0 = arith.constant 0 : i32
    %c0_i32_1 = arith.constant 0 : i32
    return %c0_i32, %c0_i32_0 : i32, i32
  }
  func.func @transform_2(%arg0: i32) -> (i32, i32) {
    %c0_i32 = arith.constant 0 : i32
    %c0_i32_0 = arith.constant 0 : i32
    %c0_i32_1 = arith.constant 0 : i32
    return %c0_i32, %c0_i32_0 : i32, i32
  }
  func.func @transform_3(%arg0: i32) -> (i32, i32) {
    %c0_i32 = arith.constant 0 : i32
    %c0_i32_0 = arith.constant 0 : i32
    return %arg0, %c0_i32 : i32, i32
  }
}

</mosaic_0001>

<llo_original>
// kernel: tpu_custom_call.1
$region0: #{tpu_custom_call.1}
  #allocation0 [shape = 'u32[]', space=smem, size = 0x4, offset = 0x4, fixed_abs, tag = 'smem constant byte address 0x4 - core index']
  #allocation1 [shape = 'u32[72,128]{1,0:T(1,128)}', space=vmem, size = 0x9000, scoped, tag = 'internal scratch']
  %s0 = inlined_call_operand.vmem [shape: f32[256,64], index: 0, kind: input, shape index: {}]
  %s1 = inlined_call_operand.vmem [shape: bf16[64,128], index: 1, kind: input, shape index: {}]
  %s2 = inlined_call_operand.vmem [shape: f32[1,128], index: 2, kind: input, shape index: {}]
  %s3 = inlined_call_operand.hbm [shape: f32[256,128], index: 3, kind: output, shape index: {}]
  %s4 = sld [smem:[#allocation0]]
  $region45: #{tpu_custom_call.1} parent=0
    _
  %s6 = ssub.s32 1, %s4
  %s7 = scalar_select 0, %s6, %s4
  $region1: #{tpu_custom_call.1} parent=0
    #allocation2 [shape = 'u8[131072]{0}', space=vmem, size = 0x20000, scoped, tag = 'output window, operand 0']
    #allocation3 [shape = 's32[2]{0}', space=sflag, size = 0x8, scoped, tag = 'scoped memory for tpu_custom_call.1']
    %8 = vsyncpa [#allocation3], 0
    %s9 = scalar_lea.sflag [#allocation3], 1
    %10 = vsyncpa %s9, 0
    loop: start=0, step=1, limit=4
    $region2: #{tpu_custom_call.1} parent=1 // loop_pre_header
      _
    $region3: #{tpu_custom_call.1} parent=1 // loop_header
      %s12 = sphi 0, %s16
      %p13 = scmp.ge.s32.totalorder %s12, 4
      %s22 = sphi 0, %s24
      %s25 = sphi 0, %s22
      %s26 = sphi 0, %s25
      %s42 = sphi 0, %s26
      %s46 = sphi 0, %s46
      %s48 = sphi 0, %s46
      %s49 = sphi 0, %s48
      %s63 = sphi 0, %s49
      %s67 = sphi 0, %s67
      %s69 = sphi 0, %s67
      %s70 = sphi 0, %s69
      %s84 = sphi 0, %s70
      %s90 = sphi 0, %s92
      %s93 = sphi 0, %s90
      %s94 = sphi 0, %s93
      %s110 = sphi 0, %s94
    $region4: #{tpu_custom_call.1} parent=1 // loop_header_branch
      %15 = sbr.rel (%p13) target = $region8
    $region5: #{tpu_custom_call.1} parent=1 // loop_body
      %s17 = ssub.s32 %s12, 1
      %s18 = ssub.s32 %s12, 2
      %s19 = sadd.s32 %s12, 1
      %s20 = ssub.s32 %s12, %s19
      %p21 = scmp.eq.s32.totalorder %s20, 0
      %s23 = sadd.s32 %s22, 1
      %s24 = scalar_select %p21, %s22, %s23
      %p27 = pneg %p21
      %p28 = scmp.eq.s32.totalorder %s12, 1
      %p29 = por %p27, %p28
      %p30 = scmp.ne.s32.totalorder %s22, %s25
      %p31 = scmp.eq.s32.totalorder %s12, 0
      %p32 = por %p30, %p31
      %p33 = scmp.ne.s32.totalorder %s22, %s25
      %p34 = scmp.eq.s32.totalorder %s17, 1
      %p35 = por %p33, %p34
      %p36 = scmp.ne.s32.totalorder %s25, %s26
      %p37 = scmp.eq.s32.totalorder %s17, 0
      %p38 = por %p36, %p37
      %p39 = scmp.ne.s32.totalorder %s25, %s26
      %p40 = scmp.eq.s32.totalorder %s18, 1
      %p41 = por %p39, %p40
      %p43 = scmp.ne.s32.totalorder %s26, %s42
      %p44 = scmp.eq.s32.totalorder %s18, 0
      %p45 = por %p43, %p44
      %s47 = sadd.s32 %s46, 1
      %p50 = scmp.eq.s32.totalorder %s12, 1
      %p51 = scmp.ne.s32.totalorder %s46, %s48
      %p52 = scmp.eq.s32.totalorder %s12, 0
      %p53 = por %p51, %p52
      %p54 = scmp.ne.s32.totalorder %s46, %s48
      %p55 = scmp.eq.s32.totalorder %s17, 1
      %p56 = por %p54, %p55
      %p57 = scmp.ne.s32.totalorder %s48, %s49
      %p58 = scmp.eq.s32.totalorder %s17, 0
      %p59 = por %p57, %p58
      %p60 = scmp.ne.s32.totalorder %s48, %s49
      %p61 = scmp.eq.s32.totalorder %s18, 1
      %p62 = por %p60, %p61
      %p64 = scmp.ne.s32.totalorder %s49, %s63
      %p65 = scmp.eq.s32.totalorder %s18, 0
      %p66 = por %p64, %p65
      %s68 = sadd.s32 %s67, 1
      %p71 = scmp.eq.s32.totalorder %s12, 1
      %p72 = scmp.ne.s32.totalorder %s67, %s69
      %p73 = scmp.eq.s32.totalorder %s12, 0
      %p74 = por %p72, %p73
      %p75 = scmp.ne.s32.totalorder %s67, %s69
      %p76 = scmp.eq.s32.totalorder %s17, 1
      %p77 = por %p75, %p76
      %p78 = scmp.ne.s32.totalorder %s69, %s70
      %p79 = scmp.eq.s32.totalorder %s17, 0
      %p80 = por %p78, %p79
      %p81 = scmp.ne.s32.totalorder %s69, %s70
      %p82 = scmp.eq.s32.totalorder %s18, 1
      %p83 = por %p81, %p82
      %p85 = scmp.ne.s32.totalorder %s70, %s84
      %p86 = scmp.eq.s32.totalorder %s18, 0
      %p87 = por %p85, %p86
      %s88 = ssub.s32 %s12, %s19
      %p89 = scmp.eq.s32.totalorder %s88, 0
      %s91 = sadd.s32 %s90, 1
      %s92 = scalar_select %p89, %s90, %s91
      %p95 = pneg %p89
      %p96 = scmp.eq.s32.totalorder %s12, 1
      %p97 = por %p95, %p96
      %p98 = scmp.ne.s32.totalorder %s90, %s93
      %p99 = scmp.eq.s32.totalorder %s12, 0
      %p100 = por %p98, %p99
      %p101 = scmp.ne.s32.totalorder %s90, %s93
      %p102 = scmp.eq.s32.totalorder %s17, 1
      %p103 = por %p101, %p102
      %p104 = scmp.ne.s32.totalorder %s93, %s94
      %p105 = scmp.eq.s32.totalorder %s17, 0
      %p106 = por %p104, %p105
      %p107 = scmp.ne.s32.totalorder %s93, %s94
      %p108 = scmp.eq.s32.totalorder %s18, 1
      %p109 = por %p107, %p108
      %p111 = scmp.ne.s32.totalorder %s94, %s110
      %p112 = scmp.eq.s32.totalorder %s18, 0
      %p113 = por %p111, %p112
      %p114 = scmp.le.s32.totalorder 1, %s12
      %p115 = scmp.lt.s32.totalorder %s12, 3
      %p116 = pnand %p114, %p115
      %p117 = pneg %p116
      // Predicated region
      $region9: #{tpu_custom_call.1} parent=5 // pred_check
        _
      $region10: #{tpu_custom_call.1} parent=5 // pred_check_branch
        %119 = sbr.rel (%p116) target = $region12
      $region11: #{tpu_custom_call.1} parent=5 // pred_region
        %s120 = ssub.s32 %s12, 1
        // Predicated region
        $region13: #{tpu_custom_call.1} parent=11 // pred_check
          %p121 = pneg %p59
        $region14: #{tpu_custom_call.1} parent=11 // pred_check_branch
          %123 = sbr.rel (%p121) target = $region16
        $region15: #{tpu_custom_call.1} parent=11 // pred_region
          _
        $region16: #{tpu_custom_call.1} parent=11 // pred_fallthru
          _
        // Predicated region
        $region17: #{tpu_custom_call.1} parent=11 // pred_check
          %p124 = pneg %p80
        $region18: #{tpu_custom_call.1} parent=11 // pred_check_branch
          %126 = sbr.rel (%p124) target = $region20
        $region19: #{tpu_custom_call.1} parent=11 // pred_region
          _
        $region20: #{tpu_custom_call.1} parent=11 // pred_fallthru
          _
      $region12: #{tpu_custom_call.1} parent=5 // pred_fallthru
        _
      %p127 = scmp.lt.s32.totalorder %s12, 2
      // Predicated region
      $region21: #{tpu_custom_call.1} parent=5 // pred_check
        %p128 = pneg %p127
      $region22: #{tpu_custom_call.1} parent=5 // pred_check_branch
        %130 = sbr.rel (%p128) target = $region24
      $region23: #{tpu_custom_call.1} parent=5 // pred_region
        // Predicated region
        $region25: #{tpu_custom_call.1} parent=23 // pred_check
          %p131 = pneg %p32
        $region26: #{tpu_custom_call.1} parent=23 // pred_check_branch
          %133 = sbr.rel (%p131) target = $region28
        $region27: #{tpu_custom_call.1} parent=23 // pred_region
          %s134 = smul.u32 16, %s12
          %p135 = scmp.lt.s32.totalorder %s134, 31
          %s136 = scalar_select %p135, %s134, 31
          %s137 = smul.addr %s136, 8
          %s138 = scalar_lea.vmem %s0, %s137
          %s139 = smul.u32 16, %s12
        $region28: #{tpu_custom_call.1} parent=23 // pred_fallthru
          _
      $region24: #{tpu_custom_call.1} parent=5 // pred_fallthru
        _
      %p140 = scmp.le.s32.totalorder 1, %s12
      %p141 = scmp.lt.s32.totalorder %s12, 3
      %p142 = pnand %p140, %p141
      %p143 = pneg %p142
      // Predicated region
      $region29: #{tpu_custom_call.1} parent=5 // pred_check
        _
      $region30: #{tpu_custom_call.1} parent=5 // pred_check_branch
        %145 = sbr.rel (%p142) target = $region32
      $region31: #{tpu_custom_call.1} parent=5 // pred_region
        %s146 = ssub.s32 %s12, 1
        %s147 = smul.u32 16, %s17
        %p148 = scmp.lt.s32.totalorder %s147, 31
        %s149 = scalar_select %p148, %s147, 31
        %s150 = smul.addr %s149, 8
        %s151 = scalar_lea.vmem %s0, %s150
        %p152 = pneg %p38
        %p153 = pneg %p35
        %p154 = pneg %p59
        %p155 = pneg %p56
        %p156 = pneg %p80
        %p157 = pneg %p77
        %p158 = pneg %p106
        %p159 = pneg %p103
        %s160 = sand.u32 %s93, 1
        %s161 = scalar_lea.sflag [#allocation3], %s160
        %s162 = sand.u32 %s93, 1
        %s163 = smul.addr %s162, 128
        %s164 = scalar_lea.vmem [#allocation2], %s163
        %s165 = smul.u32 16, %s17
        %p166 = scmp.lt.s32.totalorder %s165, 31
        %s167 = scalar_select %p166, %s165, 31
        %s168 = smul.addr %s167, 8
        %s169 = scalar_lea.vmem %s0, %s168
        %s170 = smul.u32 16, %s17
        %s171 = smul.u32 16, %s17
        %v173 = vld [vmem:[%s169] sm:$0xff]
        %v174 = vld [vmem:[%s169 + $0x8] sm:$0xff]
        %v175 = vld [vmem:[%s169 + $0x10] sm:$0xff]
        %v176 = vld [vmem:[%s169 + $0x18] sm:$0xff]
        %v177 = vld [vmem:[%s169 + $0x20] sm:$0xff]
        %v178 = vld [vmem:[%s169 + $0x28] sm:$0xff]
        %v179 = vld [vmem:[%s169 + $0x30] sm:$0xff]
        %v180 = vld [vmem:[%s169 + $0x38] sm:$0xff]
        %v181 = vld [vmem:[%s169 + $0x40] sm:$0xff]
        %v182 = vld [vmem:[%s169 + $0x48] sm:$0xff]
        %v183 = vld [vmem:[%s169 + $0x50] sm:$0xff]
        %v184 = vld [vmem:[%s169 + $0x58] sm:$0xff]
        %v185 = vld [vmem:[%s169 + $0x60] sm:$0xff]
        %v186 = vld [vmem:[%s169 + $0x68] sm:$0xff]
        %v187 = vld [vmem:[%s169 + $0x70] sm:$0xff]
        %v188 = vld [vmem:[%s169 + $0x78] sm:$0xff]
        %v189 = vpack.c.bf16 %v174, %v173
        %v190 = vpack.c.bf16 %v176, %v175
        %v191 = vpack.c.bf16 %v178, %v177
        %v192 = vpack.c.bf16 %v180, %v179
        %v193 = vpack.c.bf16 %v182, %v181
        %v194 = vpack.c.bf16 %v184, %v183
        %v195 = vpack.c.bf16 %v186, %v185
        %v196 = vpack.c.bf16 %v188, %v187
        %v197 = vld [vmem:[%s1] sm:$0xf]
        %v198 = vld [vmem:[%s1 + $0x4] sm:$0xf]
        %v199 = vld [vmem:[%s1 + $0x8] sm:$0xf]
        %v200 = vld [vmem:[%s1 + $0xc] sm:$0xf]
        %v201 = vld [vmem:[%s1 + $0x10] sm:$0xf]
        %v202 = vld [vmem:[%s1 + $0x14] sm:$0xf]
        %v203 = vld [vmem:[%s1 + $0x18] sm:$0xf]
        %v204 = vld [vmem:[%s1 + $0x1c] sm:$0xf]
        %v205 = vld [vmem:[%s2] sm:$0x1]
        %v207 = vperm.slane %v205, 0
        %v217 = vunpack.c.l.b16 %v197
        %v218 = vunpack.c.l.b16 %v198
        %v219 = vunpack.c.l.b16 %v199
        %v220 = vunpack.c.l.b16 %v200
        %v221 = vunpack.c.l.b16 %v201
        %v222 = vunpack.c.l.b16 %v202
        %v223 = vunpack.c.l.b16 %v203
        %v224 = vunpack.c.l.b16 %v204
        %v225 = vpack.c.b16 %v218, %v217
        %v226 = vpack.c.b16 %v220, %v219
        %v227 = vpack.c.b16 %v222, %v221
        %v228 = vpack.c.b16 %v224, %v223
        %vm233 = vcmask 523264
        %v235 = vsel %vm233, %v189, 0
        %v238 = vsel %vm233, %v190, 0
        %v241 = vsel %vm233, %v191, 0
        %v244 = vsel %vm233, %v192, 0
        %v247 = vsel %vm233, %v193, 0
        %v250 = vsel %vm233, %v194, 0
        %v253 = vsel %vm233, %v195, 0
        %v256 = vsel %vm233, %v196, 0
        %258 = vmatpush.bf16.msra.mxu0 0
        %259 = vmatpush.bf16.msra.mxu0 0
        %260 = vmatpush.bf16.msra.mxu0 0
        %261 = vmatpush.bf16.msra.mxu0 0
        %262 = vmatpush.bf16.msra.mxu0 %v228
        %263 = vmatpush.bf16.msra.mxu0 %v227
        %264 = vmatpush.bf16.msra.mxu0 %v226
        %265 = vmatpush.bf16.msra.mxu0 %v225
        %266 = vmatmul.bf16.gmra.mxu0 %v235
        %v267 = vpop.f32.mrf.mxu0
        %v268 = vadd.f32 %v207, %v267
        %v269 = vpop.f32.mrf.mxu0
        %v270 = vadd.f32 %v207, %v269
        %271 = vmatmul.bf16.gmra.mxu0 %v238
        %v272 = vpop.f32.mrf.mxu0
        %v273 = vadd.f32 %v207, %v272
        %v274 = vpop.f32.mrf.mxu0
        %v275 = vadd.f32 %v207, %v274
        %276 = vmatmul.bf16.gmra.mxu0 %v241
        %v277 = vpop.f32.mrf.mxu0
        %v278 = vadd.f32 %v207, %v277
        %v279 = vpop.f32.mrf.mxu0
        %v280 = vadd.f32 %v207, %v279
        %281 = vmatmul.bf16.gmra.mxu0 %v244
        %v282 = vpop.f32.mrf.mxu0
        %v283 = vadd.f32 %v207, %v282
        %v284 = vpop.f32.mrf.mxu0
        %v285 = vadd.f32 %v207, %v284
        %286 = vmatmul.bf16.gmra.mxu0 %v247
        %v287 = vpop.f32.mrf.mxu0
        %v288 = vadd.f32 %v207, %v287
        %v289 = vpop.f32.mrf.mxu0
        %v290 = vadd.f32 %v207, %v289
        %291 = vmatmul.bf16.gmra.mxu0 %v250
        %v292 = vpop.f32.mrf.mxu0
        %v293 = vadd.f32 %v207, %v292
        %v294 = vpop.f32.mrf.mxu0
        %v295 = vadd.f32 %v207, %v294
        %296 = vmatmul.bf16.gmra.mxu0 %v253
        %v297 = vpop.f32.mrf.mxu0
        %v298 = vadd.f32 %v207, %v297
        %v299 = vpop.f32.mrf.mxu0
        %v300 = vadd.f32 %v207, %v299
        %301 = vmatmul.bf16.gmra.mxu0 %v256
        %v302 = vpop.f32.mrf.mxu0
        %v303 = vadd.f32 %v207, %v302
        %v304 = vpop.f32.mrf.mxu0
        %v305 = vadd.f32 %v207, %v304
        %306 = vdwg.mxu0
        %v307 = vand.u32 2147483647, %v268
        %vm308 = vcmp.le.f32.partialorder %v307, 0.7853982
        %vm309 = vcmp.lt.s32.totalorder %v268, 0
        %v310 = vand.u32 %v268, 2139095040
        %v311 = vshrl.u32 %v310, 23
        %v312 = vsub.s32 %v311, 127
        %v313 = vand.u32 2147483647, %v268
        %v314 = vand.u32 %v313, 8388607
        %v315 = vor.u32 %v314, 8388608
        %v316 = vsub.s32 0, %v315
        %v317 = vadd.s32 %v312, 1
        %vm318 = vcmp.gt.s32.totalorder %v317, 0
        %v319 = vsel %vm318, %v317, 0
        %v320 = vshrl.u32 %v319, 5
        %v321 = vand.u32 %v319, 31
        %v322 = vsub.s32 32, %v321
        %v323 = vshrl.u32 683565275, %v322
        %v324 = vshll.u32 683565275, %v321
        %v325 = vshrl.u32 2475754826, %v322
        %v326 = vor.u32 %v324, %v325
        %v327 = vshll.u32 2475754826, %v321
        %v328 = vshrl.u32 2131351028, %v322
        %v329 = vor.u32 %v327, %v328
        %v330 = vshll.u32 2131351028, %v321
        %v331 = vshrl.u32 2102212464, %v322
        %v332 = vor.u32 %v330, %v331
        %v333 = vshll.u32 2102212464, %v321
        %v334 = vshrl.u32 920167782, %v322
        %v335 = vor.u32 %v333, %v334
        %v336 = vshll.u32 920167782, %v321
        %v337 = vshrl.u32 1326507024, %v322
        %v338 = vor.u32 %v336, %v337
        %vm339 = vcmp.lt.s32.totalorder %v320, 1
        %vm340 = vcmp.lt.s32.totalorder %v320, 2
        %vm341 = vcmp.lt.s32.totalorder %v320, 3
        %vm342 = vcmp.lt.s32.totalorder %v320, 4
        %v343 = vsel %vm339, %v323, %v326
        %v344 = vsel %vm342, %v332, 2102212464
        %v345 = vsel %vm341, %v329, %v344
        %v346 = vsel %vm340, %v343, %v345
        %v347 = vsel %vm339, %v326, %v329
        %v348 = vsel %vm342, %v335, 920167782
        %v349 = vsel %vm341, %v332, %v348
        %v350 = vsel %vm340, %v347, %v349
        %v351 = vsel %vm339, %v329, %v332
        %v352 = vsel %vm342, %v338, 1326507024
        %v353 = vsel %vm341, %v335, %v352
        %v354 = vsel %vm340, %v351, %v353
        %v355 = vshll.u32 %v315, 8
        %v356 = vand.u32 %v355, 65535
        %v357 = vshrl.u32 %v355, 16
        %v358 = vand.u32 %v354, 65535
        %v359 = vshrl.u32 %v354, 16
        %v360 = vmul.u32 %v356, %v358
        %v361 = vmul.u32 %v356, %v359
        %v362 = vmul.u32 %v357, %v358
        %v363 = vmul.u32 %v357, %v359
        %v364 = vshll.u32 %v361, 16
        %v365 = vshrl.u32 %v361, 16
        %v366 = vshll.u32 %v362, 16
        %v367 = vshrl.u32 %v362, 16
        %vm368 = vc.u32 %v360, %v364
        %v369 = vsel %vm368, 1, 0
        %v370 = vadd.s32 %v360, %v364
        %v371 = vadd.s32 %v363, %v369
        %vm372 = vc.u32 %v370, %v366
        %v373 = vsel %vm372, 1, 0
        %v374 = vadd.s32 %v370, %v366
        %v375 = vadd.s32 %v371, %v373
        %v376 = vadd.s32 %v375, %v365
        %v377 = vadd.s32 %v376, %v367
        %v378 = vand.u32 %v355, 65535
        %v379 = vshrl.u32 %v355, 16
        %v380 = vand.u32 %v350, 65535
        %v381 = vshrl.u32 %v350, 16
        %v382 = vmul.u32 %v378, %v380
        %v383 = vmul.u32 %v378, %v381
        %v384 = vmul.u32 %v379, %v380
        %v385 = vmul.u32 %v379, %v381
        %v386 = vshll.u32 %v383, 16
        %v387 = vshrl.u32 %v383, 16
        %v388 = vshll.u32 %v384, 16
        %v389 = vshrl.u32 %v384, 16
        %vm390 = vc.u32 %v382, %v386
        %v391 = vsel %vm390, 1, 0
        %v392 = vadd.s32 %v382, %v386
        %v393 = vadd.s32 %v385, %v391
        %vm394 = vc.u32 %v392, %v388
        %v395 = vsel %vm394, 1, 0
        %v396 = vadd.s32 %v392, %v388
        %v397 = vadd.s32 %v393, %v395
        %v398 = vadd.s32 %v397, %v387
        %v399 = vadd.s32 %v398, %v389
        %v400 = vmul.u32 %v355, %v346
        %v401 = vadd.s32 %v377, %v396
        %vm402 = vc.u32 %v377, %v396
        %v403 = vadd.s32 %v399, 1
        %v404 = vsel %vm402, %v403, %v399
        %v405 = vadd.s32 %v400, %v404
        %v406 = vadd.s32 %v405, 536870912
        %v407 = vshrl.u32 %v406, 30
        %v408 = vshll.u32 %v407, 30
        %v409 = vsub.s32 %v405, %v408
        %vm410 = vcmp.lt.s32.totalorder %v409, 0
        %v411 = vsub.s32 0, %v409
        %v412 = vsel %vm410, %v411, %v409
        %v413 = vclz %v412
        %v414 = vsub.s32 %v413, 2
        %vm415 = vcmp.gt.s32.totalorder 0, %v414
        %v416 = vsel %vm415, 0, %v414
        %v417 = vsub.s32 32, %v416
        %v418 = vshll.u32 %v409, %v416
        %v419 = vshrl.u32 %v401, %v417
        %v420 = vor.u32 %v418, %v419
        %v421 = vsub.s32 4294967266, %v416
        %v422 = vadd.s32 %v421, 127
        %v423 = vshll.u32 %v422, 23
        %v424 = vor.u32 4788187, %v423
        %v425 = vand.u32 2147483647, %v424
        %v427 = vcvt.s32.f32 %v420
        %v428 = vmul.f32 %v427, %v425
        %v429 = vxor.u32 %v428, 2147483648
        %v430 = vsel %vm309, %v429, %v428
        %v431 = vsub.s32 4, %v407
        %v432 = vsel %vm309, %v431, %v407
        %v433 = vsel %vm308, %v268, %v430
        %v434 = vsel %vm308, 0, %v432
        %v435 = vmul.f32 %v433, %v433
        %v436 = vmul.f32 %v435, -0.001358992
        %v437 = vadd.f32 %v436, 0.041655596
        %v438 = vmul.f32 %v435, %v437
        %v439 = vadd.f32 %v438, -0.4999988
        %v440 = vmul.f32 %v435, %v439
        %v441 = vadd.f32 1.0, %v440
        %v442 = vmul.f32 %v433, %v433
        %v443 = vmul.f32 %v442, -0.00019511016
        %v444 = vadd.f32 %v443, 0.008332121
        %v445 = vmul.f32 %v442, %v444
        %v446 = vadd.f32 %v445, -0.16666654
        %v447 = vmul.f32 %v442, %v446
        %v448 = vadd.f32 %v447, 1.0
        %v449 = vmul.f32 %v448, %v433
        %vm450 = vweird.f32 %v268
        %v451 = vadd.s32 %v434, 3
        %v452 = vand.u32 %v451, 3
        %vm453 = vcmp.lt.s32.totalorder %v452, 2
        %vm454 = vcmp.eq.s32.totalorder %v452, 0
        %v455 = vxor.u32 %v449, 2147483648
        %v456 = vsel %vm454, %v441, %v455
        %vm457 = vcmp.eq.s32.totalorder %v452, 2
        %v458 = vxor.u32 %v441, 2147483648
        %v459 = vsel %vm457, %v458, %v449
        %v460 = vsel %vm453, %v456, %v459
        %v461 = vsel %vm450, nan, %v460
        %v462 = vand.u32 2147483647, %v270
        %vm463 = vcmp.le.f32.partialorder %v462, 0.7853982
        %vm464 = vcmp.lt.s32.totalorder %v270, 0
        %v465 = vand.u32 %v270, 2139095040
        %v466 = vshrl.u32 %v465, 23
        %v467 = vsub.s32 %v466, 127
        %v468 = vand.u32 2147483647, %v270
        %v469 = vand.u32 %v468, 8388607
        %v470 = vor.u32 %v469, 8388608
        %v471 = vsub.s32 0, %v470
        %v472 = vadd.s32 %v467, 1
        %vm473 = vcmp.gt.s32.totalorder %v472, 0
        %v474 = vsel %vm473, %v472, 0
        %v475 = vshrl.u32 %v474, 5
        %v476 = vand.u32 %v474, 31
        %v477 = vsub.s32 32, %v476
        %v478 = vshrl.u32 683565275, %v477
        %v479 = vshll.u32 683565275, %v476
        %v480 = vshrl.u32 2475754826, %v477
        %v481 = vor.u32 %v479, %v480
        %v482 = vshll.u32 2475754826, %v476
        %v483 = vshrl.u32 2131351028, %v477
        %v484 = vor.u32 %v482, %v483
        %v485 = vshll.u32 2131351028, %v476
        %v486 = vshrl.u32 2102212464, %v477
        %v487 = vor.u32 %v485, %v486
        %v488 = vshll.u32 2102212464, %v476
        %v489 = vshrl.u32 920167782, %v477
        %v490 = vor.u32 %v488, %v489
        %v491 = vshll.u32 920167782, %v476
        %v492 = vshrl.u32 1326507024, %v477
        %v493 = vor.u32 %v491, %v492
        %vm494 = vcmp.lt.s32.totalorder %v475, 1
        %vm495 = vcmp.lt.s32.totalorder %v475, 2
        %vm496 = vcmp.lt.s32.totalorder %v475, 3
        %vm497 = vcmp.lt.s32.totalorder %v475, 4
        %v498 = vsel %vm494, %v478, %v481
        %v499 = vsel %vm497, %v487, 2102212464
        %v500 = vsel %vm496, %v484, %v499
        %v501 = vsel %vm495, %v498, %v500
        %v502 = vsel %vm494, %v481, %v484
        %v503 = vsel %vm497, %v490, 920167782
        %v504 = vsel %vm496, %v487, %v503
        %v505 = vsel %vm495, %v502, %v504
        %v506 = vsel %vm494, %v484, %v487
        %v507 = vsel %vm497, %v493, 1326507024
        %v508 = vsel %vm496, %v490, %v507
        %v509 = vsel %vm495, %v506, %v508
        %v510 = vshll.u32 %v470, 8
        %v511 = vand.u32 %v510, 65535
        %v512 = vshrl.u32 %v510, 16
        %v513 = vand.u32 %v509, 65535
        %v514 = vshrl.u32 %v509, 16
        %v515 = vmul.u32 %v511, %v513
        %v516 = vmul.u32 %v511, %v514
        %v517 = vmul.u32 %v512, %v513
        %v518 = vmul.u32 %v512, %v514
        %v519 = vshll.u32 %v516, 16
        %v520 = vshrl.u32 %v516, 16
        %v521 = vshll.u32 %v517, 16
        %v522 = vshrl.u32 %v517, 16
        %vm523 = vc.u32 %v515, %v519
        %v524 = vsel %vm523, 1, 0
        %v525 = vadd.s32 %v515, %v519
        %v526 = vadd.s32 %v518, %v524
        %vm527 = vc.u32 %v525, %v521
        %v528 = vsel %vm527, 1, 0
        %v529 = vadd.s32 %v525, %v521
        %v530 = vadd.s32 %v526, %v528
        %v531 = vadd.s32 %v530, %v520
        %v532 = vadd.s32 %v531, %v522
        %v533 = vand.u32 %v510, 65535
        %v534 = vshrl.u32 %v510, 16
        %v535 = vand.u32 %v505, 65535
        %v536 = vshrl.u32 %v505, 16
        %v537 = vmul.u32 %v533, %v535
        %v538 = vmul.u32 %v533, %v536
        %v539 = vmul.u32 %v534, %v535
        %v540 = vmul.u32 %v534, %v536
        %v541 = vshll.u32 %v538, 16
        %v542 = vshrl.u32 %v538, 16
        %v543 = vshll.u32 %v539, 16
        %v544 = vshrl.u32 %v539, 16
        %vm545 = vc.u32 %v537, %v541
        %v546 = vsel %vm545, 1, 0
        %v547 = vadd.s32 %v537, %v541
        %v548 = vadd.s32 %v540, %v546
        %vm549 = vc.u32 %v547, %v543
        %v550 = vsel %vm549, 1, 0
        %v551 = vadd.s32 %v547, %v543
        %v552 = vadd.s32 %v548, %v550
        %v553 = vadd.s32 %v552, %v542
        %v554 = vadd.s32 %v553, %v544
        %v555 = vmul.u32 %v510, %v501
        %v556 = vadd.s32 %v532, %v551
        %vm557 = vc.u32 %v532, %v551
        %v558 = vadd.s32 %v554, 1
        %v559 = vsel %vm557, %v558, %v554
        %v560 = vadd.s32 %v555, %v559
        %v561 = vadd.s32 %v560, 536870912
        %v562 = vshrl.u32 %v561, 30
        %v563 = vshll.u32 %v562, 30
        %v564 = vsub.s32 %v560, %v563
        %vm565 = vcmp.lt.s32.totalorder %v564, 0
        %v566 = vsub.s32 0, %v564
        %v567 = vsel %vm565, %v566, %v564
        %v568 = vclz %v567
        %v569 = vsub.s32 %v568, 2
        %vm570 = vcmp.gt.s32.totalorder 0, %v569
        %v571 = vsel %vm570, 0, %v569
        %v572 = vsub.s32 32, %v571
        %v573 = vshll.u32 %v564, %v571
        %v574 = vshrl.u32 %v556, %v572
        %v575 = vor.u32 %v573, %v574
        %v576 = vsub.s32 4294967266, %v571
        %v577 = vadd.s32 %v576, 127
        %v578 = vshll.u32 %v577, 23
        %v579 = vor.u32 4788187, %v578
        %v580 = vand.u32 2147483647, %v579
        %v582 = vcvt.s32.f32 %v575
        %v583 = vmul.f32 %v582, %v580
        %v584 = vxor.u32 %v583, 2147483648
        %v585 = vsel %vm464, %v584, %v583
        %v586 = vsub.s32 4, %v562
        %v587 = vsel %vm464, %v586, %v562
        %v588 = vsel %vm463, %v270, %v585
        %v589 = vsel %vm463, 0, %v587
        %v590 = vmul.f32 %v588, %v588
        %v591 = vmul.f32 %v590, -0.001358992
        %v592 = vadd.f32 %v591, 0.041655596
        %v593 = vmul.f32 %v590, %v592
        %v594 = vadd.f32 %v593, -0.4999988
        %v595 = vmul.f32 %v590, %v594
        %v596 = vadd.f32 1.0, %v595
        %v597 = vmul.f32 %v588, %v588
        %v598 = vmul.f32 %v597, -0.00019511016
        %v599 = vadd.f32 %v598, 0.008332121
        %v600 = vmul.f32 %v597, %v599
        %v601 = vadd.f32 %v600, -0.16666654
        %v602 = vmul.f32 %v597, %v601
        %v603 = vadd.f32 %v602, 1.0
        %v604 = vmul.f32 %v603, %v588
        %vm605 = vweird.f32 %v270
        %v606 = vadd.s32 %v589, 3
        %v607 = vand.u32 %v606, 3
        %vm608 = vcmp.lt.s32.totalorder %v607, 2
        %vm609 = vcmp.eq.s32.totalorder %v607, 0
        %v610 = vxor.u32 %v604, 2147483648
        %v611 = vsel %vm609, %v596, %v610
        %vm612 = vcmp.eq.s32.totalorder %v607, 2
        %v613 = vxor.u32 %v596, 2147483648
        %v614 = vsel %vm612, %v613, %v604
        %v615 = vsel %vm608, %v611, %v614
        %v616 = vsel %vm605, nan, %v615
        %v617 = vand.u32 2147483647, %v273
        %vm618 = vcmp.le.f32.partialorder %v617, 0.7853982
        %vm619 = vcmp.lt.s32.totalorder %v273, 0
        %v620 = vand.u32 %v273, 2139095040
        %v621 = vshrl.u32 %v620, 23
        %v622 = vsub.s32 %v621, 127
        %v623 = vand.u32 2147483647, %v273
        %v624 = vand.u32 %v623, 8388607
        %v625 = vor.u32 %v624, 8388608
        %v626 = vsub.s32 0, %v625
        %v627 = vadd.s32 %v622, 1
        %vm628 = vcmp.gt.s32.totalorder %v627, 0
        %v629 = vsel %vm628, %v627, 0
        %v630 = vshrl.u32 %v629, 5
        %v631 = vand.u32 %v629, 31
        %v632 = vsub.s32 32, %v631
        %v633 = vshrl.u32 683565275, %v632
        %v634 = vshll.u32 683565275, %v631
        %v635 = vshrl.u32 2475754826, %v632
        %v636 = vor.u32 %v634, %v635
        %v637 = vshll.u32 2475754826, %v631
        %v638 = vshrl.u32 2131351028, %v632
        %v639 = vor.u32 %v637, %v638
        %v640 = vshll.u32 2131351028, %v631
        %v641 = vshrl.u32 2102212464, %v632
        %v642 = vor.u32 %v640, %v641
        %v643 = vshll.u32 2102212464, %v631
        %v644 = vshrl.u32 920167782, %v632
        %v645 = vor.u32 %v643, %v644
        %v646 = vshll.u32 920167782, %v631
        %v647 = vshrl.u32 1326507024, %v632
        %v648 = vor.u32 %v646, %v647
        %vm649 = vcmp.lt.s32.totalorder %v630, 1
        %vm650 = vcmp.lt.s32.totalorder %v630, 2
        %vm651 = vcmp.lt.s32.totalorder %v630, 3
        %vm652 = vcmp.lt.s32.totalorder %v630, 4
        %v653 = vsel %vm649, %v633, %v636
        %v654 = vsel %vm652, %v642, 2102212464
        %v655 = vsel %vm651, %v639, %v654
        %v656 = vsel %vm650, %v653, %v655
        %v657 = vsel %vm649, %v636, %v639
        %v658 = vsel %vm652, %v645, 920167782
        %v659 = vsel %vm651, %v642, %v658
        %v660 = vsel %vm650, %v657, %v659
        %v661 = vsel %vm649, %v639, %v642
        %v662 = vsel %vm652, %v648, 1326507024
        %v663 = vsel %vm651, %v645, %v662
        %v664 = vsel %vm650, %v661, %v663
        %v665 = vshll.u32 %v625, 8
        %v666 = vand.u32 %v665, 65535
        %v667 = vshrl.u32 %v665, 16
        %v668 = vand.u32 %v664, 65535
        %v669 = vshrl.u32 %v664, 16
        %v670 = vmul.u32 %v666, %v668
        %v671 = vmul.u32 %v666, %v669
        %v672 = vmul.u32 %v667, %v668
        %v673 = vmul.u32 %v667, %v669
        %v674 = vshll.u32 %v671, 16
        %v675 = vshrl.u32 %v671, 16
        %v676 = vshll.u32 %v672, 16
        %v677 = vshrl.u32 %v672, 16
        %vm678 = vc.u32 %v670, %v674
        %v679 = vsel %vm678, 1, 0
        %v680 = vadd.s32 %v670, %v674
        %v681 = vadd.s32 %v673, %v679
        %vm682 = vc.u32 %v680, %v676
        %v683 = vsel %vm682, 1, 0
        %v684 = vadd.s32 %v680, %v676
        %v685 = vadd.s32 %v681, %v683
        %v686 = vadd.s32 %v685, %v675
        %v687 = vadd.s32 %v686, %v677
        %v688 = vand.u32 %v665, 65535
        %v689 = vshrl.u32 %v665, 16
        %v690 = vand.u32 %v660, 65535
        %v691 = vshrl.u32 %v660, 16
        %v692 = vmul.u32 %v688, %v690
        %v693 = vmul.u32 %v688, %v691
        %v694 = vmul.u32 %v689, %v690
        %v695 = vmul.u32 %v689, %v691
        %v696 = vshll.u32 %v693, 16
        %v697 = vshrl.u32 %v693, 16
        %v698 = vshll.u32 %v694, 16
        %v699 = vshrl.u32 %v694, 16
        %vm700 = vc.u32 %v692, %v696
        %v701 = vsel %vm700, 1, 0
        %v702 = vadd.s32 %v692, %v696
        %v703 = vadd.s32 %v695, %v701
        %vm704 = vc.u32 %v702, %v698
        %v705 = vsel %vm704, 1, 0
        %v706 = vadd.s32 %v702, %v698
        %v707 = vadd.s32 %v703, %v705
        %v708 = vadd.s32 %v707, %v697
        %v709 = vadd.s32 %v708, %v699
        %v710 = vmul.u32 %v665, %v656
        %v711 = vadd.s32 %v687, %v706
        %vm712 = vc.u32 %v687, %v706
        %v713 = vadd.s32 %v709, 1
        %v714 = vsel %vm712, %v713, %v709
        %v715 = vadd.s32 %v710, %v714
        %v716 = vadd.s32 %v715, 536870912
        %v717 = vshrl.u32 %v716, 30
        %v718 = vshll.u32 %v717, 30
        %v719 = vsub.s32 %v715, %v718
        %vm720 = vcmp.lt.s32.totalorder %v719, 0
        %v721 = vsub.s32 0, %v719
        %v722 = vsel %vm720, %v721, %v719
        %v723 = vclz %v722
        %v724 = vsub.s32 %v723, 2
        %vm725 = vcmp.gt.s32.totalorder 0, %v724
        %v726 = vsel %vm725, 0, %v724
        %v727 = vsub.s32 32, %v726
        %v728 = vshll.u32 %v719, %v726
        %v729 = vshrl.u32 %v711, %v727
        %v730 = vor.u32 %v728, %v729
        %v731 = vsub.s32 4294967266, %v726
        %v732 = vadd.s32 %v731, 127
        %v733 = vshll.u32 %v732, 23
        %v734 = vor.u32 4788187, %v733
        %v735 = vand.u32 2147483647, %v734
        %v737 = vcvt.s32.f32 %v730
        %v738 = vmul.f32 %v737, %v735
        %v739 = vxor.u32 %v738, 2147483648
        %v740 = vsel %vm619, %v739, %v738
        %v741 = vsub.s32 4, %v717
        %v742 = vsel %vm619, %v741, %v717
        %v743 = vsel %vm618, %v273, %v740
        %v744 = vsel %vm618, 0, %v742
        %v745 = vmul.f32 %v743, %v743
        %v746 = vmul.f32 %v745, -0.001358992
        %v747 = vadd.f32 %v746, 0.041655596
        %v748 = vmul.f32 %v745, %v747
        %v749 = vadd.f32 %v748, -0.4999988
        %v750 = vmul.f32 %v745, %v749
        %v751 = vadd.f32 1.0, %v750
        %v752 = vmul.f32 %v743, %v743
        %v753 = vmul.f32 %v752, -0.00019511016
        %v754 = vadd.f32 %v753, 0.008332121
        %v755 = vmul.f32 %v752, %v754
        %v756 = vadd.f32 %v755, -0.16666654
        %v757 = vmul.f32 %v752, %v756
        %v758 = vadd.f32 %v757, 1.0
        %v759 = vmul.f32 %v758, %v743
        %vm760 = vweird.f32 %v273
        %v761 = vadd.s32 %v744, 3
        %v762 = vand.u32 %v761, 3
        %vm763 = vcmp.lt.s32.totalorder %v762, 2
        %vm764 = vcmp.eq.s32.totalorder %v762, 0
        %v765 = vxor.u32 %v759, 2147483648
        %v766 = vsel %vm764, %v751, %v765
        %vm767 = vcmp.eq.s32.totalorder %v762, 2
        %v768 = vxor.u32 %v751, 2147483648
        %v769 = vsel %vm767, %v768, %v759
        %v770 = vsel %vm763, %v766, %v769
        %v771 = vsel %vm760, nan, %v770
        %v772 = vand.u32 2147483647, %v275
        %vm773 = vcmp.le.f32.partialorder %v772, 0.7853982
        %vm774 = vcmp.lt.s32.totalorder %v275, 0
        %v775 = vand.u32 %v275, 2139095040
        %v776 = vshrl.u32 %v775, 23
        %v777 = vsub.s32 %v776, 127
        %v778 = vand.u32 2147483647, %v275
        %v779 = vand.u32 %v778, 8388607
        %v780 = vor.u32 %v779, 8388608
        %v781 = vsub.s32 0, %v780
        %v782 = vadd.s32 %v777, 1
        %vm783 = vcmp.gt.s32.totalorder %v782, 0
        %v784 = vsel %vm783, %v782, 0
        %v785 = vshrl.u32 %v784, 5
        %v786 = vand.u32 %v784, 31
        %v787 = vsub.s32 32, %v786
        %v788 = vshrl.u32 683565275, %v787
        %v789 = vshll.u32 683565275, %v786
        %v790 = vshrl.u32 2475754826, %v787
        %v791 = vor.u32 %v789, %v790
        %v792 = vshll.u32 2475754826, %v786
        %v793 = vshrl.u32 2131351028, %v787
        %v794 = vor.u32 %v792, %v793
        %v795 = vshll.u32 2131351028, %v786
        %v796 = vshrl.u32 2102212464, %v787
        %v797 = vor.u32 %v795, %v796
        %v798 = vshll.u32 2102212464, %v786
        %v799 = vshrl.u32 920167782, %v787
        %v800 = vor.u32 %v798, %v799
        %v801 = vshll.u32 920167782, %v786
        %v802 = vshrl.u32 1326507024, %v787
        %v803 = vor.u32 %v801, %v802
        %vm804 = vcmp.lt.s32.totalorder %v785, 1
        %vm805 = vcmp.lt.s32.totalorder %v785, 2
        %vm806 = vcmp.lt.s32.totalorder %v785, 3
        %vm807 = vcmp.lt.s32.totalorder %v785, 4
        %v808 = vsel %vm804, %v788, %v791
        %v809 = vsel %vm807, %v797, 2102212464
        %v810 = vsel %vm806, %v794, %v809
        %v811 = vsel %vm805, %v808, %v810
        %v812 = vsel %vm804, %v791, %v794
        %v813 = vsel %vm807, %v800, 920167782
        %v814 = vsel %vm806, %v797, %v813
        %v815 = vsel %vm805, %v812, %v814
        %v816 = vsel %vm804, %v794, %v797
        %v817 = vsel %vm807, %v803, 1326507024
        %v818 = vsel %vm806, %v800, %v817
        %v819 = vsel %vm805, %v816, %v818
        %v820 = vshll.u32 %v780, 8
        %v821 = vand.u32 %v820, 65535
        %v822 = vshrl.u32 %v820, 16
        %v823 = vand.u32 %v819, 65535
        %v824 = vshrl.u32 %v819, 16
        %v825 = vmul.u32 %v821, %v823
        %v826 = vmul.u32 %v821, %v824
        %v827 = vmul.u32 %v822, %v823
        %v828 = vmul.u32 %v822, %v824
        %v829 = vshll.u32 %v826, 16
        %v830 = vshrl.u32 %v826, 16
        %v831 = vshll.u32 %v827, 16
        %v832 = vshrl.u32 %v827, 16
        %vm833 = vc.u32 %v825, %v829
        %v834 = vsel %vm833, 1, 0
        %v835 = vadd.s32 %v825, %v829
        %v836 = vadd.s32 %v828, %v834
        %vm837 = vc.u32 %v835, %v831
        %v838 = vsel %vm837, 1, 0
        %v839 = vadd.s32 %v835, %v831
        %v840 = vadd.s32 %v836, %v838
        %v841 = vadd.s32 %v840, %v830
        %v842 = vadd.s32 %v841, %v832
        %v843 = vand.u32 %v820, 65535
        %v844 = vshrl.u32 %v820, 16
        %v845 = vand.u32 %v815, 65535
        %v846 = vshrl.u32 %v815, 16
        %v847 = vmul.u32 %v843, %v845
        %v848 = vmul.u32 %v843, %v846
        %v849 = vmul.u32 %v844, %v845
        %v850 = vmul.u32 %v844, %v846
        %v851 = vshll.u32 %v848, 16
        %v852 = vshrl.u32 %v848, 16
        %v853 = vshll.u32 %v849, 16
        %v854 = vshrl.u32 %v849, 16
        %vm855 = vc.u32 %v847, %v851
        %v856 = vsel %vm855, 1, 0
        %v857 = vadd.s32 %v847, %v851
        %v858 = vadd.s32 %v850, %v856
        %vm859 = vc.u32 %v857, %v853
        %v860 = vsel %vm859, 1, 0
        %v861 = vadd.s32 %v857, %v853
        %v862 = vadd.s32 %v858, %v860
        %v863 = vadd.s32 %v862, %v852
        %v864 = vadd.s32 %v863, %v854
        %v865 = vmul.u32 %v820, %v811
        %v866 = vadd.s32 %v842, %v861
        %vm867 = vc.u32 %v842, %v861
        %v868 = vadd.s32 %v864, 1
        %v869 = vsel %vm867, %v868, %v864
        %v870 = vadd.s32 %v865, %v869
        %v871 = vadd.s32 %v870, 536870912
        %v872 = vshrl.u32 %v871, 30
        %v873 = vshll.u32 %v872, 30
        %v874 = vsub.s32 %v870, %v873
        %vm875 = vcmp.lt.s32.totalorder %v874, 0
        %v876 = vsub.s32 0, %v874
        %v877 = vsel %vm875, %v876, %v874
        %v878 = vclz %v877
        %v879 = vsub.s32 %v878, 2
        %vm880 = vcmp.gt.s32.totalorder 0, %v879
        %v881 = vsel %vm880, 0, %v879
        %v882 = vsub.s32 32, %v881
        %v883 = vshll.u32 %v874, %v881
        %v884 = vshrl.u32 %v866, %v882
        %v885 = vor.u32 %v883, %v884
        %v886 = vsub.s32 4294967266, %v881
        %v887 = vadd.s32 %v886, 127
        %v888 = vshll.u32 %v887, 23
        %v889 = vor.u32 4788187, %v888
        %v890 = vand.u32 2147483647, %v889
        %v892 = vcvt.s32.f32 %v885
        %v893 = vmul.f32 %v892, %v890
        %v894 = vxor.u32 %v893, 2147483648
        %v895 = vsel %vm774, %v894, %v893
        %v896 = vsub.s32 4, %v872
        %v897 = vsel %vm774, %v896, %v872
        %v898 = vsel %vm773, %v275, %v895
        %v899 = vsel %vm773, 0, %v897
        %v900 = vmul.f32 %v898, %v898
        %v901 = vmul.f32 %v900, -0.001358992
        %v902 = vadd.f32 %v901, 0.041655596
        %v903 = vmul.f32 %v900, %v902
        %v904 = vadd.f32 %v903, -0.4999988
        %v905 = vmul.f32 %v900, %v904
        %v906 = vadd.f32 1.0, %v905
        %v907 = vmul.f32 %v898, %v898
        %v908 = vmul.f32 %v907, -0.00019511016
        %v909 = vadd.f32 %v908, 0.008332121
        %v910 = vmul.f32 %v907, %v909
        %v911 = vadd.f32 %v910, -0.16666654
        %v912 = vmul.f32 %v907, %v911
        %v913 = vadd.f32 %v912, 1.0
        %v914 = vmul.f32 %v913, %v898
        %vm915 = vweird.f32 %v275
        %v916 = vadd.s32 %v899, 3
        %v917 = vand.u32 %v916, 3
        %vm918 = vcmp.lt.s32.totalorder %v917, 2
        %vm919 = vcmp.eq.s32.totalorder %v917, 0
        %v920 = vxor.u32 %v914, 2147483648
        %v921 = vsel %vm919, %v906, %v920
        %vm922 = vcmp.eq.s32.totalorder %v917, 2
        %v923 = vxor.u32 %v906, 2147483648
        %v924 = vsel %vm922, %v923, %v914
        %v925 = vsel %vm918, %v921, %v924
        %v926 = vsel %vm915, nan, %v925
        %v927 = vand.u32 2147483647, %v278
        %vm928 = vcmp.le.f32.partialorder %v927, 0.7853982
        %vm929 = vcmp.lt.s32.totalorder %v278, 0
        %v930 = vand.u32 %v278, 2139095040
        %v931 = vshrl.u32 %v930, 23
        %v932 = vsub.s32 %v931, 127
        %v933 = vand.u32 2147483647, %v278
        %v934 = vand.u32 %v933, 8388607
        %v935 = vor.u32 %v934, 8388608
        %v936 = vsub.s32 0, %v935
        %v937 = vadd.s32 %v932, 1
        %vm938 = vcmp.gt.s32.totalorder %v937, 0
        %v939 = vsel %vm938, %v937, 0
        %v940 = vshrl.u32 %v939, 5
        %v941 = vand.u32 %v939, 31
        %v942 = vsub.s32 32, %v941
        %v943 = vshrl.u32 683565275, %v942
        %v944 = vshll.u32 683565275, %v941
        %v945 = vshrl.u32 2475754826, %v942
        %v946 = vor.u32 %v944, %v945
        %v947 = vshll.u32 2475754826, %v941
        %v948 = vshrl.u32 2131351028, %v942
        %v949 = vor.u32 %v947, %v948
        %v950 = vshll.u32 2131351028, %v941
        %v951 = vshrl.u32 2102212464, %v942
        %v952 = vor.u32 %v950, %v951
        %v953 = vshll.u32 2102212464, %v941
        %v954 = vshrl.u32 920167782, %v942
        %v955 = vor.u32 %v953, %v954
        %v956 = vshll.u32 920167782, %v941
        %v957 = vshrl.u32 1326507024, %v942
        %v958 = vor.u32 %v956, %v957
        %vm959 = vcmp.lt.s32.totalorder %v940, 1
        %vm960 = vcmp.lt.s32.totalorder %v940, 2
        %vm961 = vcmp.lt.s32.totalorder %v940, 3
        %vm962 = vcmp.lt.s32.totalorder %v940, 4
        %v963 = vsel %vm959, %v943, %v946
        %v964 = vsel %vm962, %v952, 2102212464
        %v965 = vsel %vm961, %v949, %v964
        %v966 = vsel %vm960, %v963, %v965
        %v967 = vsel %vm959, %v946, %v949
        %v968 = vsel %vm962, %v955, 920167782
        %v969 = vsel %vm961, %v952, %v968
        %v970 = vsel %vm960, %v967, %v969
        %v971 = vsel %vm959, %v949, %v952
        %v972 = vsel %vm962, %v958, 1326507024
        %v973 = vsel %vm961, %v955, %v972
        %v974 = vsel %vm960, %v971, %v973
        %v975 = vshll.u32 %v935, 8
        %v976 = vand.u32 %v975, 65535
        %v977 = vshrl.u32 %v975, 16
        %v978 = vand.u32 %v974, 65535
        %v979 = vshrl.u32 %v974, 16
        %v980 = vmul.u32 %v976, %v978
        %v981 = vmul.u32 %v976, %v979
        %v982 = vmul.u32 %v977, %v978
        %v983 = vmul.u32 %v977, %v979
        %v984 = vshll.u32 %v981, 16
        %v985 = vshrl.u32 %v981, 16
        %v986 = vshll.u32 %v982, 16
        %v987 = vshrl.u32 %v982, 16
        %vm988 = vc.u32 %v980, %v984
        %v989 = vsel %vm988, 1, 0
        %v990 = vadd.s32 %v980, %v984
        %v991 = vadd.s32 %v983, %v989
        %vm992 = vc.u32 %v990, %v986
        %v993 = vsel %vm992, 1, 0
        %v994 = vadd.s32 %v990, %v986
        %v995 = vadd.s32 %v991, %v993
        %v996 = vadd.s32 %v995, %v985
        %v997 = vadd.s32 %v996, %v987
        %v998 = vand.u32 %v975, 65535
        %v999 = vshrl.u32 %v975, 16
        %v1000 = vand.u32 %v970, 65535
        %v1001 = vshrl.u32 %v970, 16
        %v1002 = vmul.u32 %v998, %v1000
        %v1003 = vmul.u32 %v998, %v1001
        %v1004 = vmul.u32 %v999, %v1000
        %v1005 = vmul.u32 %v999, %v1001
        %v1006 = vshll.u32 %v1003, 16
        %v1007 = vshrl.u32 %v1003, 16
        %v1008 = vshll.u32 %v1004, 16
        %v1009 = vshrl.u32 %v1004, 16
        %vm1010 = vc.u32 %v1002, %v1006
        %v1011 = vsel %vm1010, 1, 0
        %v1012 = vadd.s32 %v1002, %v1006
        %v1013 = vadd.s32 %v1005, %v1011
        %vm1014 = vc.u32 %v1012, %v1008
        %v1015 = vsel %vm1014, 1, 0
        %v1016 = vadd.s32 %v1012, %v1008
        %v1017 = vadd.s32 %v1013, %v1015
        %v1018 = vadd.s32 %v1017, %v1007
        %v1019 = vadd.s32 %v1018, %v1009
        %v1020 = vmul.u32 %v975, %v966
        %v1021 = vadd.s32 %v997, %v1016
        %vm1022 = vc.u32 %v997, %v1016
        %v1023 = vadd.s32 %v1019, 1
        %v1024 = vsel %vm1022, %v1023, %v1019
        %v1025 = vadd.s32 %v1020, %v1024
        %v1026 = vadd.s32 %v1025, 536870912
        %v1027 = vshrl.u32 %v1026, 30
        %v1028 = vshll.u32 %v1027, 30
        %v1029 = vsub.s32 %v1025, %v1028
        %vm1030 = vcmp.lt.s32.totalorder %v1029, 0
        %v1031 = vsub.s32 0, %v1029
        %v1032 = vsel %vm1030, %v1031, %v1029
        %v1033 = vclz %v1032
        %v1034 = vsub.s32 %v1033, 2
        %vm1035 = vcmp.gt.s32.totalorder 0, %v1034
        %v1036 = vsel %vm1035, 0, %v1034
        %v1037 = vsub.s32 32, %v1036
        %v1038 = vshll.u32 %v1029, %v1036
        %v1039 = vshrl.u32 %v1021, %v1037
        %v1040 = vor.u32 %v1038, %v1039
        %v1041 = vsub.s32 4294967266, %v1036
        %v1042 = vadd.s32 %v1041, 127
        %v1043 = vshll.u32 %v1042, 23
        %v1044 = vor.u32 4788187, %v1043
        %v1045 = vand.u32 2147483647, %v1044
        %v1047 = vcvt.s32.f32 %v1040
        %v1048 = vmul.f32 %v1047, %v1045
        %v1049 = vxor.u32 %v1048, 2147483648
        %v1050 = vsel %vm929, %v1049, %v1048
        %v1051 = vsub.s32 4, %v1027
        %v1052 = vsel %vm929, %v1051, %v1027
        %v1053 = vsel %vm928, %v278, %v1050
        %v1054 = vsel %vm928, 0, %v1052
        %v1055 = vmul.f32 %v1053, %v1053
        %v1056 = vmul.f32 %v1055, -0.001358992
        %v1057 = vadd.f32 %v1056, 0.041655596
        %v1058 = vmul.f32 %v1055, %v1057
        %v1059 = vadd.f32 %v1058, -0.4999988
        %v1060 = vmul.f32 %v1055, %v1059
        %v1061 = vadd.f32 1.0, %v1060
        %v1062 = vmul.f32 %v1053, %v1053
        %v1063 = vmul.f32 %v1062, -0.00019511016
        %v1064 = vadd.f32 %v1063, 0.008332121
        %v1065 = vmul.f32 %v1062, %v1064
        %v1066 = vadd.f32 %v1065, -0.16666654
        %v1067 = vmul.f32 %v1062, %v1066
        %v1068 = vadd.f32 %v1067, 1.0
        %v1069 = vmul.f32 %v1068, %v1053
        %vm1070 = vweird.f32 %v278
        %v1071 = vadd.s32 %v1054, 3
        %v1072 = vand.u32 %v1071, 3
        %vm1073 = vcmp.lt.s32.totalorder %v1072, 2
        %vm1074 = vcmp.eq.s32.totalorder %v1072, 0
        %v1075 = vxor.u32 %v1069, 2147483648
        %v1076 = vsel %vm1074, %v1061, %v1075
        %vm1077 = vcmp.eq.s32.totalorder %v1072, 2
        %v1078 = vxor.u32 %v1061, 2147483648
        %v1079 = vsel %vm1077, %v1078, %v1069
        %v1080 = vsel %vm1073, %v1076, %v1079
        %v1081 = vsel %vm1070, nan, %v1080
        %v1082 = vand.u32 2147483647, %v280
        %vm1083 = vcmp.le.f32.partialorder %v1082, 0.7853982
        %vm1084 = vcmp.lt.s32.totalorder %v280, 0
        %v1085 = vand.u32 %v280, 2139095040
        %v1086 = vshrl.u32 %v1085, 23
        %v1087 = vsub.s32 %v1086, 127
        %v1088 = vand.u32 2147483647, %v280
        %v1089 = vand.u32 %v1088, 8388607
        %v1090 = vor.u32 %v1089, 8388608
        %v1091 = vsub.s32 0, %v1090
        %v1092 = vadd.s32 %v1087, 1
        %vm1093 = vcmp.gt.s32.totalorder %v1092, 0
        %v1094 = vsel %vm1093, %v1092, 0
        %v1095 = vshrl.u32 %v1094, 5
        %v1096 = vand.u32 %v1094, 31
        %v1097 = vsub.s32 32, %v1096
        %v1098 = vshrl.u32 683565275, %v1097
        %v1099 = vshll.u32 683565275, %v1096
        %v1100 = vshrl.u32 2475754826, %v1097
        %v1101 = vor.u32 %v1099, %v1100
        %v1102 = vshll.u32 2475754826, %v1096
        %v1103 = vshrl.u32 2131351028, %v1097
        %v1104 = vor.u32 %v1102, %v1103
        %v1105 = vshll.u32 2131351028, %v1096
        %v1106 = vshrl.u32 2102212464, %v1097
        %v1107 = vor.u32 %v1105, %v1106
        %v1108 = vshll.u32 2102212464, %v1096
        %v1109 = vshrl.u32 920167782, %v1097
        %v1110 = vor.u32 %v1108, %v1109
        %v1111 = vshll.u32 920167782, %v1096
        %v1112 = vshrl.u32 1326507024, %v1097
        %v1113 = vor.u32 %v1111, %v1112
        %vm1114 = vcmp.lt.s32.totalorder %v1095, 1
        %vm1115 = vcmp.lt.s32.totalorder %v1095, 2
        %vm1116 = vcmp.lt.s32.totalorder %v1095, 3
        %vm1117 = vcmp.lt.s32.totalorder %v1095, 4
        %v1118 = vsel %vm1114, %v1098, %v1101
        %v1119 = vsel %vm1117, %v1107, 2102212464
        %v1120 = vsel %vm1116, %v1104, %v1119
        %v1121 = vsel %vm1115, %v1118, %v1120
        %v1122 = vsel %vm1114, %v1101, %v1104
        %v1123 = vsel %vm1117, %v1110, 920167782
        %v1124 = vsel %vm1116, %v1107, %v1123
        %v1125 = vsel %vm1115, %v1122, %v1124
        %v1126 = vsel %vm1114, %v1104, %v1107
        %v1127 = vsel %vm1117, %v1113, 1326507024
        %v1128 = vsel %vm1116, %v1110, %v1127
        %v1129 = vsel %vm1115, %v1126, %v1128
        %v1130 = vshll.u32 %v1090, 8
        %v1131 = vand.u32 %v1130, 65535
        %v1132 = vshrl.u32 %v1130, 16
        %v1133 = vand.u32 %v1129, 65535
        %v1134 = vshrl.u32 %v1129, 16
        %v1135 = vmul.u32 %v1131, %v1133
        %v1136 = vmul.u32 %v1131, %v1134
        %v1137 = vmul.u32 %v1132, %v1133
        %v1138 = vmul.u32 %v1132, %v1134
        %v1139 = vshll.u32 %v1136, 16
        %v1140 = vshrl.u32 %v1136, 16
        %v1141 = vshll.u32 %v1137, 16
        %v1142 = vshrl.u32 %v1137, 16
        %vm1143 = vc.u32 %v1135, %v1139
        %v1144 = vsel %vm1143, 1, 0
        %v1145 = vadd.s32 %v1135, %v1139
        %v1146 = vadd.s32 %v1138, %v1144
        %vm1147 = vc.u32 %v1145, %v1141
        %v1148 = vsel %vm1147, 1, 0
        %v1149 = vadd.s32 %v1145, %v1141
        %v1150 = vadd.s32 %v1146, %v1148
        %v1151 = vadd.s32 %v1150, %v1140
        %v1152 = vadd.s32 %v1151, %v1142
        %v1153 = vand.u32 %v1130, 65535
        %v1154 = vshrl.u32 %v1130, 16
        %v1155 = vand.u32 %v1125, 65535
        %v1156 = vshrl.u32 %v1125, 16
        %v1157 = vmul.u32 %v1153, %v1155
        %v1158 = vmul.u32 %v1153, %v1156
        %v1159 = vmul.u32 %v1154, %v1155
        %v1160 = vmul.u32 %v1154, %v1156
        %v1161 = vshll.u32 %v1158, 16
        %v1162 = vshrl.u32 %v1158, 16
        %v1163 = vshll.u32 %v1159, 16
        %v1164 = vshrl.u32 %v1159, 16
        %vm1165 = vc.u32 %v1157, %v1161
        %v1166 = vsel %vm1165, 1, 0
        %v1167 = vadd.s32 %v1157, %v1161
        %v1168 = vadd.s32 %v1160, %v1166
        %vm1169 = vc.u32 %v1167, %v1163
        %v1170 = vsel %vm1169, 1, 0
        %v1171 = vadd.s32 %v1167, %v1163
        %v1172 = vadd.s32 %v1168, %v1170
        %v1173 = vadd.s32 %v1172, %v1162
        %v1174 = vadd.s32 %v1173, %v1164
        %v1175 = vmul.u32 %v1130, %v1121
        %v1176 = vadd.s32 %v1152, %v1171
        %vm1177 = vc.u32 %v1152, %v1171
        %v1178 = vadd.s32 %v1174, 1
        %v1179 = vsel %vm1177, %v1178, %v1174
        %v1180 = vadd.s32 %v1175, %v1179
        %v1181 = vadd.s32 %v1180, 536870912
        %v1182 = vshrl.u32 %v1181, 30
        %v1183 = vshll.u32 %v1182, 30
        %v1184 = vsub.s32 %v1180, %v1183
        %vm1185 = vcmp.lt.s32.totalorder %v1184, 0
        %v1186 = vsub.s32 0, %v1184
        %v1187 = vsel %vm1185, %v1186, %v1184
        %v1188 = vclz %v1187
        %v1189 = vsub.s32 %v1188, 2
        %vm1190 = vcmp.gt.s32.totalorder 0, %v1189
        %v1191 = vsel %vm1190, 0, %v1189
        %v1192 = vsub.s32 32, %v1191
        %v1193 = vshll.u32 %v1184, %v1191
        %v1194 = vshrl.u32 %v1176, %v1192
        %v1195 = vor.u32 %v1193, %v1194
        %v1196 = vsub.s32 4294967266, %v1191
        %v1197 = vadd.s32 %v1196, 127
        %v1198 = vshll.u32 %v1197, 23
        %v1199 = vor.u32 4788187, %v1198
        %v1200 = vand.u32 2147483647, %v1199
        %v1202 = vcvt.s32.f32 %v1195
        %v1203 = vmul.f32 %v1202, %v1200
        %v1204 = vxor.u32 %v1203, 2147483648
        %v1205 = vsel %vm1084, %v1204, %v1203
        %v1206 = vsub.s32 4, %v1182
        %v1207 = vsel %vm1084, %v1206, %v1182
        %v1208 = vsel %vm1083, %v280, %v1205
        %v1209 = vsel %vm1083, 0, %v1207
        %v1210 = vmul.f32 %v1208, %v1208
        %v1211 = vmul.f32 %v1210, -0.001358992
        %v1212 = vadd.f32 %v1211, 0.041655596
        %v1213 = vmul.f32 %v1210, %v1212
        %v1214 = vadd.f32 %v1213, -0.4999988
        %v1215 = vmul.f32 %v1210, %v1214
        %v1216 = vadd.f32 1.0, %v1215
        %v1217 = vmul.f32 %v1208, %v1208
        %v1218 = vmul.f32 %v1217, -0.00019511016
        %v1219 = vadd.f32 %v1218, 0.008332121
        %v1220 = vmul.f32 %v1217, %v1219
        %v1221 = vadd.f32 %v1220, -0.16666654
        %v1222 = vmul.f32 %v1217, %v1221
        %v1223 = vadd.f32 %v1222, 1.0
        %v1224 = vmul.f32 %v1223, %v1208
        %vm1225 = vweird.f32 %v280
        %v1226 = vadd.s32 %v1209, 3
        %v1227 = vand.u32 %v1226, 3
        %vm1228 = vcmp.lt.s32.totalorder %v1227, 2
        %vm1229 = vcmp.eq.s32.totalorder %v1227, 0
        %v1230 = vxor.u32 %v1224, 2147483648
        %v1231 = vsel %vm1229, %v1216, %v1230
        %vm1232 = vcmp.eq.s32.totalorder %v1227, 2
        %v1233 = vxor.u32 %v1216, 2147483648
        %v1234 = vsel %vm1232, %v1233, %v1224
        %v1235 = vsel %vm1228, %v1231, %v1234
        %v1236 = vsel %vm1225, nan, %v1235
        %v1237 = vand.u32 2147483647, %v283
        %vm1238 = vcmp.le.f32.partialorder %v1237, 0.7853982
        %vm1239 = vcmp.lt.s32.totalorder %v283, 0
        %v1240 = vand.u32 %v283, 2139095040
        %v1241 = vshrl.u32 %v1240, 23
        %v1242 = vsub.s32 %v1241, 127
        %v1243 = vand.u32 2147483647, %v283
        %v1244 = vand.u32 %v1243, 8388607
        %v1245 = vor.u32 %v1244, 8388608
        %v1246 = vsub.s32 0, %v1245
        %v1247 = vadd.s32 %v1242, 1
        %vm1248 = vcmp.gt.s32.totalorder %v1247, 0
        %v1249 = vsel %vm1248, %v1247, 0
        %v1250 = vshrl.u32 %v1249, 5
        %v1251 = vand.u32 %v1249, 31
        %v1252 = vsub.s32 32, %v1251
        %v1253 = vshrl.u32 683565275, %v1252
        %v1254 = vshll.u32 683565275, %v1251
        %v1255 = vshrl.u32 2475754826, %v1252
        %v1256 = vor.u32 %v1254, %v1255
        %v1257 = vshll.u32 2475754826, %v1251
        %v1258 = vshrl.u32 2131351028, %v1252
        %v1259 = vor.u32 %v1257, %v1258
        %v1260 = vshll.u32 2131351028, %v1251
        %v1261 = vshrl.u32 2102212464, %v1252
        %v1262 = vor.u32 %v1260, %v1261
        %v1263 = vshll.u32 2102212464, %v1251
        %v1264 = vshrl.u32 920167782, %v1252
        %v1265 = vor.u32 %v1263, %v1264
        %v1266 = vshll.u32 920167782, %v1251
        %v1267 = vshrl.u32 1326507024, %v1252
        %v1268 = vor.u32 %v1266, %v1267
        %vm1269 = vcmp.lt.s32.totalorder %v1250, 1
        %vm1270 = vcmp.lt.s32.totalorder %v1250, 2
        %vm1271 = vcmp.lt.s32.totalorder %v1250, 3
        %vm1272 = vcmp.lt.s32.totalorder %v1250, 4
        %v1273 = vsel %vm1269, %v1253, %v1256
        %v1274 = vsel %vm1272, %v1262, 2102212464
        %v1275 = vsel %vm1271, %v1259, %v1274
        %v1276 = vsel %vm1270, %v1273, %v1275
        %v1277 = vsel %vm1269, %v1256, %v1259
        %v1278 = vsel %vm1272, %v1265, 920167782
        %v1279 = vsel %vm1271, %v1262, %v1278
        %v1280 = vsel %vm1270, %v1277, %v1279
        %v1281 = vsel %vm1269, %v1259, %v1262
        %v1282 = vsel %vm1272, %v1268, 1326507024
        %v1283 = vsel %vm1271, %v1265, %v1282
        %v1284 = vsel %vm1270, %v1281, %v1283
        %v1285 = vshll.u32 %v1245, 8
        %v1286 = vand.u32 %v1285, 65535
        %v1287 = vshrl.u32 %v1285, 16
        %v1288 = vand.u32 %v1284, 65535
        %v1289 = vshrl.u32 %v1284, 16
        %v1290 = vmul.u32 %v1286, %v1288
        %v1291 = vmul.u32 %v1286, %v1289
        %v1292 = vmul.u32 %v1287, %v1288
        %v1293 = vmul.u32 %v1287, %v1289
        %v1294 = vshll.u32 %v1291, 16
        %v1295 = vshrl.u32 %v1291, 16
        %v1296 = vshll.u32 %v1292, 16
        %v1297 = vshrl.u32 %v1292, 16
        %vm1298 = vc.u32 %v1290, %v1294
        %v1299 = vsel %vm1298, 1, 0
        %v1300 = vadd.s32 %v1290, %v1294
        %v1301 = vadd.s32 %v1293, %v1299
        %vm1302 = vc.u32 %v1300, %v1296
        %v1303 = vsel %vm1302, 1, 0
        %v1304 = vadd.s32 %v1300, %v1296
        %v1305 = vadd.s32 %v1301, %v1303
        %v1306 = vadd.s32 %v1305, %v1295
        %v1307 = vadd.s32 %v1306, %v1297
        %v1308 = vand.u32 %v1285, 65535
        %v1309 = vshrl.u32 %v1285, 16
        %v1310 = vand.u32 %v1280, 65535
        %v1311 = vshrl.u32 %v1280, 16
        %v1312 = vmul.u32 %v1308, %v1310
        %v1313 = vmul.u32 %v1308, %v1311
        %v1314 = vmul.u32 %v1309, %v1310
        %v1315 = vmul.u32 %v1309, %v1311
        %v1316 = vshll.u32 %v1313, 16
        %v1317 = vshrl.u32 %v1313, 16
        %v1318 = vshll.u32 %v1314, 16
        %v1319 = vshrl.u32 %v1314, 16
        %vm1320 = vc.u32 %v1312, %v1316
        %v1321 = vsel %vm1320, 1, 0
        %v1322 = vadd.s32 %v1312, %v1316
        %v1323 = vadd.s32 %v1315, %v1321
        %vm1324 = vc.u32 %v1322, %v1318
        %v1325 = vsel %vm1324, 1, 0
        %v1326 = vadd.s32 %v1322, %v1318
        %v1327 = vadd.s32 %v1323, %v1325
        %v1328 = vadd.s32 %v1327, %v1317
        %v1329 = vadd.s32 %v1328, %v1319
        %v1330 = vmul.u32 %v1285, %v1276
        %v1331 = vadd.s32 %v1307, %v1326
        %vm1332 = vc.u32 %v1307, %v1326
        %v1333 = vadd.s32 %v1329, 1
        %v1334 = vsel %vm1332, %v1333, %v1329
        %v1335 = vadd.s32 %v1330, %v1334
        %v1336 = vadd.s32 %v1335, 536870912
        %v1337 = vshrl.u32 %v1336, 30
        %v1338 = vshll.u32 %v1337, 30
        %v1339 = vsub.s32 %v1335, %v1338
        %vm1340 = vcmp.lt.s32.totalorder %v1339, 0
        %v1341 = vsub.s32 0, %v1339
        %v1342 = vsel %vm1340, %v1341, %v1339
        %v1343 = vclz %v1342
        %v1344 = vsub.s32 %v1343, 2
        %vm1345 = vcmp.gt.s32.totalorder 0, %v1344
        %v1346 = vsel %vm1345, 0, %v1344
        %v1347 = vsub.s32 32, %v1346
        %v1348 = vshll.u32 %v1339, %v1346
        %v1349 = vshrl.u32 %v1331, %v1347
        %v1350 = vor.u32 %v1348, %v1349
        %v1351 = vsub.s32 4294967266, %v1346
        %v1352 = vadd.s32 %v1351, 127
        %v1353 = vshll.u32 %v1352, 23
        %v1354 = vor.u32 4788187, %v1353
        %v1355 = vand.u32 2147483647, %v1354
        %v1357 = vcvt.s32.f32 %v1350
        %v1358 = vmul.f32 %v1357, %v1355
        %v1359 = vxor.u32 %v1358, 2147483648
        %v1360 = vsel %vm1239, %v1359, %v1358
        %v1361 = vsub.s32 4, %v1337
        %v1362 = vsel %vm1239, %v1361, %v1337
        %v1363 = vsel %vm1238, %v283, %v1360
        %v1364 = vsel %vm1238, 0, %v1362
        %v1365 = vmul.f32 %v1363, %v1363
        %v1366 = vmul.f32 %v1365, -0.001358992
        %v1367 = vadd.f32 %v1366, 0.041655596
        %v1368 = vmul.f32 %v1365, %v1367
        %v1369 = vadd.f32 %v1368, -0.4999988
        %v1370 = vmul.f32 %v1365, %v1369
        %v1371 = vadd.f32 1.0, %v1370
        %v1372 = vmul.f32 %v1363, %v1363
        %v1373 = vmul.f32 %v1372, -0.00019511016
        %v1374 = vadd.f32 %v1373, 0.008332121
        %v1375 = vmul.f32 %v1372, %v1374
        %v1376 = vadd.f32 %v1375, -0.16666654
        %v1377 = vmul.f32 %v1372, %v1376
        %v1378 = vadd.f32 %v1377, 1.0
        %v1379 = vmul.f32 %v1378, %v1363
        %vm1380 = vweird.f32 %v283
        %v1381 = vadd.s32 %v1364, 3
        %v1382 = vand.u32 %v1381, 3
        %vm1383 = vcmp.lt.s32.totalorder %v1382, 2
        %vm1384 = vcmp.eq.s32.totalorder %v1382, 0
        %v1385 = vxor.u32 %v1379, 2147483648
        %v1386 = vsel %vm1384, %v1371, %v1385
        %vm1387 = vcmp.eq.s32.totalorder %v1382, 2
        %v1388 = vxor.u32 %v1371, 2147483648
        %v1389 = vsel %vm1387, %v1388, %v1379
        %v1390 = vsel %vm1383, %v1386, %v1389
        %v1391 = vsel %vm1380, nan, %v1390
        %v1392 = vand.u32 2147483647, %v285
        %vm1393 = vcmp.le.f32.partialorder %v1392, 0.7853982
        %vm1394 = vcmp.lt.s32.totalorder %v285, 0
        %v1395 = vand.u32 %v285, 2139095040
        %v1396 = vshrl.u32 %v1395, 23
        %v1397 = vsub.s32 %v1396, 127
        %v1398 = vand.u32 2147483647, %v285
        %v1399 = vand.u32 %v1398, 8388607
        %v1400 = vor.u32 %v1399, 8388608
        %v1401 = vsub.s32 0, %v1400
        %v1402 = vadd.s32 %v1397, 1
        %vm1403 = vcmp.gt.s32.totalorder %v1402, 0
        %v1404 = vsel %vm1403, %v1402, 0
        %v1405 = vshrl.u32 %v1404, 5
        %v1406 = vand.u32 %v1404, 31
        %v1407 = vsub.s32 32, %v1406
        %v1408 = vshrl.u32 683565275, %v1407
        %v1409 = vshll.u32 683565275, %v1406
        %v1410 = vshrl.u32 2475754826, %v1407
        %v1411 = vor.u32 %v1409, %v1410
        %v1412 = vshll.u32 2475754826, %v1406
        %v1413 = vshrl.u32 2131351028, %v1407
        %v1414 = vor.u32 %v1412, %v1413
        %v1415 = vshll.u32 2131351028, %v1406
        %v1416 = vshrl.u32 2102212464, %v1407
        %v1417 = vor.u32 %v1415, %v1416
        %v1418 = vshll.u32 2102212464, %v1406
        %v1419 = vshrl.u32 920167782, %v1407
        %v1420 = vor.u32 %v1418, %v1419
        %v1421 = vshll.u32 920167782, %v1406
        %v1422 = vshrl.u32 1326507024, %v1407
        %v1423 = vor.u32 %v1421, %v1422
        %vm1424 = vcmp.lt.s32.totalorder %v1405, 1
        %vm1425 = vcmp.lt.s32.totalorder %v1405, 2
        %vm1426 = vcmp.lt.s32.totalorder %v1405, 3
        %vm1427 = vcmp.lt.s32.totalorder %v1405, 4
        %v1428 = vsel %vm1424, %v1408, %v1411
        %v1429 = vsel %vm1427, %v1417, 2102212464
        %v1430 = vsel %vm1426, %v1414, %v1429
        %v1431 = vsel %vm1425, %v1428, %v1430
        %v1432 = vsel %vm1424, %v1411, %v1414
        %v1433 = vsel %vm1427, %v1420, 920167782
        %v1434 = vsel %vm1426, %v1417, %v1433
        %v1435 = vsel %vm1425, %v1432, %v1434
        %v1436 = vsel %vm1424, %v1414, %v1417
        %v1437 = vsel %vm1427, %v1423, 1326507024
        %v1438 = vsel %vm1426, %v1420, %v1437
        %v1439 = vsel %vm1425, %v1436, %v1438
        %v1440 = vshll.u32 %v1400, 8
        %v1441 = vand.u32 %v1440, 65535
        %v1442 = vshrl.u32 %v1440, 16
        %v1443 = vand.u32 %v1439, 65535
        %v1444 = vshrl.u32 %v1439, 16
        %v1445 = vmul.u32 %v1441, %v1443
        %v1446 = vmul.u32 %v1441, %v1444
        %v1447 = vmul.u32 %v1442, %v1443
        %v1448 = vmul.u32 %v1442, %v1444
        %v1449 = vshll.u32 %v1446, 16
        %v1450 = vshrl.u32 %v1446, 16
        %v1451 = vshll.u32 %v1447, 16
        %v1452 = vshrl.u32 %v1447, 16
        %vm1453 = vc.u32 %v1445, %v1449
        %v1454 = vsel %vm1453, 1, 0
        %v1455 = vadd.s32 %v1445, %v1449
        %v1456 = vadd.s32 %v1448, %v1454
        %vm1457 = vc.u32 %v1455, %v1451
        %v1458 = vsel %vm1457, 1, 0
        %v1459 = vadd.s32 %v1455, %v1451
        %v1460 = vadd.s32 %v1456, %v1458
        %v1461 = vadd.s32 %v1460, %v1450
        %v1462 = vadd.s32 %v1461, %v1452
        %v1463 = vand.u32 %v1440, 65535
        %v1464 = vshrl.u32 %v1440, 16
        %v1465 = vand.u32 %v1435, 65535
        %v1466 = vshrl.u32 %v1435, 16
        %v1467 = vmul.u32 %v1463, %v1465
        %v1468 = vmul.u32 %v1463, %v1466
        %v1469 = vmul.u32 %v1464, %v1465
        %v1470 = vmul.u32 %v1464, %v1466
        %v1471 = vshll.u32 %v1468, 16
        %v1472 = vshrl.u32 %v1468, 16
        %v1473 = vshll.u32 %v1469, 16
        %v1474 = vshrl.u32 %v1469, 16
        %vm1475 = vc.u32 %v1467, %v1471
        %v1476 = vsel %vm1475, 1, 0
        %v1477 = vadd.s32 %v1467, %v1471
        %v1478 = vadd.s32 %v1470, %v1476
        %vm1479 = vc.u32 %v1477, %v1473
        %v1480 = vsel %vm1479, 1, 0
        %v1481 = vadd.s32 %v1477, %v1473
        %v1482 = vadd.s32 %v1478, %v1480
        %v1483 = vadd.s32 %v1482, %v1472
        %v1484 = vadd.s32 %v1483, %v1474
        %v1485 = vmul.u32 %v1440, %v1431
        %v1486 = vadd.s32 %v1462, %v1481
        %vm1487 = vc.u32 %v1462, %v1481
        %v1488 = vadd.s32 %v1484, 1
        %v1489 = vsel %vm1487, %v1488, %v1484
        %v1490 = vadd.s32 %v1485, %v1489
        %v1491 = vadd.s32 %v1490, 536870912
        %v1492 = vshrl.u32 %v1491, 30
        %v1493 = vshll.u32 %v1492, 30
        %v1494 = vsub.s32 %v1490, %v1493
        %vm1495 = vcmp.lt.s32.totalorder %v1494, 0
        %v1496 = vsub.s32 0, %v1494
        %v1497 = vsel %vm1495, %v1496, %v1494
        %v1498 = vclz %v1497
        %v1499 = vsub.s32 %v1498, 2
        %vm1500 = vcmp.gt.s32.totalorder 0, %v1499
        %v1501 = vsel %vm1500, 0, %v1499
        %v1502 = vsub.s32 32, %v1501
        %v1503 = vshll.u32 %v1494, %v1501
        %v1504 = vshrl.u32 %v1486, %v1502
        %v1505 = vor.u32 %v1503, %v1504
        %v1506 = vsub.s32 4294967266, %v1501
        %v1507 = vadd.s32 %v1506, 127
        %v1508 = vshll.u32 %v1507, 23
        %v1509 = vor.u32 4788187, %v1508
        %v1510 = vand.u32 2147483647, %v1509
        %v1512 = vcvt.s32.f32 %v1505
        %v1513 = vmul.f32 %v1512, %v1510
        %v1514 = vxor.u32 %v1513, 2147483648
        %v1515 = vsel %vm1394, %v1514, %v1513
        %v1516 = vsub.s32 4, %v1492
        %v1517 = vsel %vm1394, %v1516, %v1492
        %v1518 = vsel %vm1393, %v285, %v1515
        %v1519 = vsel %vm1393, 0, %v1517
        %v1520 = vmul.f32 %v1518, %v1518
        %v1521 = vmul.f32 %v1520, -0.001358992
        %v1522 = vadd.f32 %v1521, 0.041655596
        %v1523 = vmul.f32 %v1520, %v1522
        %v1524 = vadd.f32 %v1523, -0.4999988
        %v1525 = vmul.f32 %v1520, %v1524
        %v1526 = vadd.f32 1.0, %v1525
        %v1527 = vmul.f32 %v1518, %v1518
        %v1528 = vmul.f32 %v1527, -0.00019511016
        %v1529 = vadd.f32 %v1528, 0.008332121
        %v1530 = vmul.f32 %v1527, %v1529
        %v1531 = vadd.f32 %v1530, -0.16666654
        %v1532 = vmul.f32 %v1527, %v1531
        %v1533 = vadd.f32 %v1532, 1.0
        %v1534 = vmul.f32 %v1533, %v1518
        %vm1535 = vweird.f32 %v285
        %v1536 = vadd.s32 %v1519, 3
        %v1537 = vand.u32 %v1536, 3
        %vm1538 = vcmp.lt.s32.totalorder %v1537, 2
        %vm1539 = vcmp.eq.s32.totalorder %v1537, 0
        %v1540 = vxor.u32 %v1534, 2147483648
        %v1541 = vsel %vm1539, %v1526, %v1540
        %vm1542 = vcmp.eq.s32.totalorder %v1537, 2
        %v1543 = vxor.u32 %v1526, 2147483648
        %v1544 = vsel %vm1542, %v1543, %v1534
        %v1545 = vsel %vm1538, %v1541, %v1544
        %v1546 = vsel %vm1535, nan, %v1545
        %v1547 = vand.u32 2147483647, %v288
        %vm1548 = vcmp.le.f32.partialorder %v1547, 0.7853982
        %vm1549 = vcmp.lt.s32.totalorder %v288, 0
        %v1550 = vand.u32 %v288, 2139095040
        %v1551 = vshrl.u32 %v1550, 23
        %v1552 = vsub.s32 %v1551, 127
        %v1553 = vand.u32 2147483647, %v288
        %v1554 = vand.u32 %v1553, 8388607
        %v1555 = vor.u32 %v1554, 8388608
        %v1556 = vsub.s32 0, %v1555
        %v1557 = vadd.s32 %v1552, 1
        %vm1558 = vcmp.gt.s32.totalorder %v1557, 0
        %v1559 = vsel %vm1558, %v1557, 0
        %v1560 = vshrl.u32 %v1559, 5
        %v1561 = vand.u32 %v1559, 31
        %v1562 = vsub.s32 32, %v1561
        %v1563 = vshrl.u32 683565275, %v1562
        %v1564 = vshll.u32 683565275, %v1561
        %v1565 = vshrl.u32 2475754826, %v1562
        %v1566 = vor.u32 %v1564, %v1565
        %v1567 = vshll.u32 2475754826, %v1561
        %v1568 = vshrl.u32 2131351028, %v1562
        %v1569 = vor.u32 %v1567, %v1568
        %v1570 = vshll.u32 2131351028, %v1561
        %v1571 = vshrl.u32 2102212464, %v1562
        %v1572 = vor.u32 %v1570, %v1571
        %v1573 = vshll.u32 2102212464, %v1561
        %v1574 = vshrl.u32 920167782, %v1562
        %v1575 = vor.u32 %v1573, %v1574
        %v1576 = vshll.u32 920167782, %v1561
        %v1577 = vshrl.u32 1326507024, %v1562
        %v1578 = vor.u32 %v1576, %v1577
        %vm1579 = vcmp.lt.s32.totalorder %v1560, 1
        %vm1580 = vcmp.lt.s32.totalorder %v1560, 2
        %vm1581 = vcmp.lt.s32.totalorder %v1560, 3
        %vm1582 = vcmp.lt.s32.totalorder %v1560, 4
        %v1583 = vsel %vm1579, %v1563, %v1566
        %v1584 = vsel %vm1582, %v1572, 2102212464
        %v1585 = vsel %vm1581, %v1569, %v1584
        %v1586 = vsel %vm1580, %v1583, %v1585
        %v1587 = vsel %vm1579, %v1566, %v1569
        %v1588 = vsel %vm1582, %v1575, 920167782
        %v1589 = vsel %vm1581, %v1572, %v1588
        %v1590 = vsel %vm1580, %v1587, %v1589
        %v1591 = vsel %vm1579, %v1569, %v1572
        %v1592 = vsel %vm1582, %v1578, 1326507024
        %v1593 = vsel %vm1581, %v1575, %v1592
        %v1594 = vsel %vm1580, %v1591, %v1593
        %v1595 = vshll.u32 %v1555, 8
        %v1596 = vand.u32 %v1595, 65535
        %v1597 = vshrl.u32 %v1595, 16
        %v1598 = vand.u32 %v1594, 65535
        %v1599 = vshrl.u32 %v1594, 16
        %v1600 = vmul.u32 %v1596, %v1598
        %v1601 = vmul.u32 %v1596, %v1599
        %v1602 = vmul.u32 %v1597, %v1598
        %v1603 = vmul.u32 %v1597, %v1599
        %v1604 = vshll.u32 %v1601, 16
        %v1605 = vshrl.u32 %v1601, 16
        %v1606 = vshll.u32 %v1602, 16
        %v1607 = vshrl.u32 %v1602, 16
        %vm1608 = vc.u32 %v1600, %v1604
        %v1609 = vsel %vm1608, 1, 0
        %v1610 = vadd.s32 %v1600, %v1604
        %v1611 = vadd.s32 %v1603, %v1609
        %vm1612 = vc.u32 %v1610, %v1606
        %v1613 = vsel %vm1612, 1, 0
        %v1614 = vadd.s32 %v1610, %v1606
        %v1615 = vadd.s32 %v1611, %v1613
        %v1616 = vadd.s32 %v1615, %v1605
        %v1617 = vadd.s32 %v1616, %v1607
        %v1618 = vand.u32 %v1595, 65535
        %v1619 = vshrl.u32 %v1595, 16
        %v1620 = vand.u32 %v1590, 65535
        %v1621 = vshrl.u32 %v1590, 16
        %v1622 = vmul.u32 %v1618, %v1620
        %v1623 = vmul.u32 %v1618, %v1621
        %v1624 = vmul.u32 %v1619, %v1620
        %v1625 = vmul.u32 %v1619, %v1621
        %v1626 = vshll.u32 %v1623, 16
        %v1627 = vshrl.u32 %v1623, 16
        %v1628 = vshll.u32 %v1624, 16
        %v1629 = vshrl.u32 %v1624, 16
        %vm1630 = vc.u32 %v1622, %v1626
        %v1631 = vsel %vm1630, 1, 0
        %v1632 = vadd.s32 %v1622, %v1626
        %v1633 = vadd.s32 %v1625, %v1631
        %vm1634 = vc.u32 %v1632, %v1628
        %v1635 = vsel %vm1634, 1, 0
        %v1636 = vadd.s32 %v1632, %v1628
        %v1637 = vadd.s32 %v1633, %v1635
        %v1638 = vadd.s32 %v1637, %v1627
        %v1639 = vadd.s32 %v1638, %v1629
        %v1640 = vmul.u32 %v1595, %v1586
        %v1641 = vadd.s32 %v1617, %v1636
        %vm1642 = vc.u32 %v1617, %v1636
        %v1643 = vadd.s32 %v1639, 1
        %v1644 = vsel %vm1642, %v1643, %v1639
        %v1645 = vadd.s32 %v1640, %v1644
        %v1646 = vadd.s32 %v1645, 536870912
        %v1647 = vshrl.u32 %v1646, 30
        %v1648 = vshll.u32 %v1647, 30
        %v1649 = vsub.s32 %v1645, %v1648
        %vm1650 = vcmp.lt.s32.totalorder %v1649, 0
        %v1651 = vsub.s32 0, %v1649
        %v1652 = vsel %vm1650, %v1651, %v1649
        %v1653 = vclz %v1652
        %v1654 = vsub.s32 %v1653, 2
        %vm1655 = vcmp.gt.s32.totalorder 0, %v1654
        %v1656 = vsel %vm1655, 0, %v1654
        %v1657 = vsub.s32 32, %v1656
        %v1658 = vshll.u32 %v1649, %v1656
        %v1659 = vshrl.u32 %v1641, %v1657
        %v1660 = vor.u32 %v1658, %v1659
        %v1661 = vsub.s32 4294967266, %v1656
        %v1662 = vadd.s32 %v1661, 127
        %v1663 = vshll.u32 %v1662, 23
        %v1664 = vor.u32 4788187, %v1663
        %v1665 = vand.u32 2147483647, %v1664
        %v1667 = vcvt.s32.f32 %v1660
        %v1668 = vmul.f32 %v1667, %v1665
        %v1669 = vxor.u32 %v1668, 2147483648
        %v1670 = vsel %vm1549, %v1669, %v1668
        %v1671 = vsub.s32 4, %v1647
        %v1672 = vsel %vm1549, %v1671, %v1647
        %v1673 = vsel %vm1548, %v288, %v1670
        %v1674 = vsel %vm1548, 0, %v1672
        %v1675 = vmul.f32 %v1673, %v1673
        %v1676 = vmul.f32 %v1675, -0.001358992
        %v1677 = vadd.f32 %v1676, 0.041655596
        %v1678 = vmul.f32 %v1675, %v1677
        %v1679 = vadd.f32 %v1678, -0.4999988
        %v1680 = vmul.f32 %v1675, %v1679
        %v1681 = vadd.f32 1.0, %v1680
        %v1682 = vmul.f32 %v1673, %v1673
        %v1683 = vmul.f32 %v1682, -0.00019511016
        %v1684 = vadd.f32 %v1683, 0.008332121
        %v1685 = vmul.f32 %v1682, %v1684
        %v1686 = vadd.f32 %v1685, -0.16666654
        %v1687 = vmul.f32 %v1682, %v1686
        %v1688 = vadd.f32 %v1687, 1.0
        %v1689 = vmul.f32 %v1688, %v1673
        %vm1690 = vweird.f32 %v288
        %v1691 = vadd.s32 %v1674, 3
        %v1692 = vand.u32 %v1691, 3
        %vm1693 = vcmp.lt.s32.totalorder %v1692, 2
        %vm1694 = vcmp.eq.s32.totalorder %v1692, 0
        %v1695 = vxor.u32 %v1689, 2147483648
        %v1696 = vsel %vm1694, %v1681, %v1695
        %vm1697 = vcmp.eq.s32.totalorder %v1692, 2
        %v1698 = vxor.u32 %v1681, 2147483648
        %v1699 = vsel %vm1697, %v1698, %v1689
        %v1700 = vsel %vm1693, %v1696, %v1699
        %v1701 = vsel %vm1690, nan, %v1700
        %v1702 = vand.u32 2147483647, %v290
        %vm1703 = vcmp.le.f32.partialorder %v1702, 0.7853982
        %vm1704 = vcmp.lt.s32.totalorder %v290, 0
        %v1705 = vand.u32 %v290, 2139095040
        %v1706 = vshrl.u32 %v1705, 23
        %v1707 = vsub.s32 %v1706, 127
        %v1708 = vand.u32 2147483647, %v290
        %v1709 = vand.u32 %v1708, 8388607
        %v1710 = vor.u32 %v1709, 8388608
        %v1711 = vsub.s32 0, %v1710
        %v1712 = vadd.s32 %v1707, 1
        %vm1713 = vcmp.gt.s32.totalorder %v1712, 0
        %v1714 = vsel %vm1713, %v1712, 0
        %v1715 = vshrl.u32 %v1714, 5
        %v1716 = vand.u32 %v1714, 31
        %v1717 = vsub.s32 32, %v1716
        %v1718 = vshrl.u32 683565275, %v1717
        %v1719 = vshll.u32 683565275, %v1716
        %v1720 = vshrl.u32 2475754826, %v1717
        %v1721 = vor.u32 %v1719, %v1720
        %v1722 = vshll.u32 2475754826, %v1716
        %v1723 = vshrl.u32 2131351028, %v1717
        %v1724 = vor.u32 %v1722, %v1723
        %v1725 = vshll.u32 2131351028, %v1716
        %v1726 = vshrl.u32 2102212464, %v1717
        %v1727 = vor.u32 %v1725, %v1726
        %v1728 = vshll.u32 2102212464, %v1716
        %v1729 = vshrl.u32 920167782, %v1717
        %v1730 = vor.u32 %v1728, %v1729
        %v1731 = vshll.u32 920167782, %v1716
        %v1732 = vshrl.u32 1326507024, %v1717
        %v1733 = vor.u32 %v1731, %v1732
        %vm1734 = vcmp.lt.s32.totalorder %v1715, 1
        %vm1735 = vcmp.lt.s32.totalorder %v1715, 2
        %vm1736 = vcmp.lt.s32.totalorder %v1715, 3
        %vm1737 = vcmp.lt.s32.totalorder %v1715, 4
        %v1738 = vsel %vm1734, %v1718, %v1721
        %v1739 = vsel %vm1737, %v1727, 2102212464
        %v1740 = vsel %vm1736, %v1724, %v1739
        %v1741 = vsel %vm1735, %v1738, %v1740
        %v1742 = vsel %vm1734, %v1721, %v1724
        %v1743 = vsel %vm1737, %v1730, 920167782
        %v1744 = vsel %vm1736, %v1727, %v1743
        %v1745 = vsel %vm1735, %v1742, %v1744
        %v1746 = vsel %vm1734, %v1724, %v1727
        %v1747 = vsel %vm1737, %v1733, 1326507024
        %v1748 = vsel %vm1736, %v1730, %v1747
        %v1749 = vsel %vm1735, %v1746, %v1748
        %v1750 = vshll.u32 %v1710, 8
        %v1751 = vand.u32 %v1750, 65535
        %v1752 = vshrl.u32 %v1750, 16
        %v1753 = vand.u32 %v1749, 65535
        %v1754 = vshrl.u32 %v1749, 16
        %v1755 = vmul.u32 %v1751, %v1753
        %v1756 = vmul.u32 %v1751, %v1754
        %v1757 = vmul.u32 %v1752, %v1753
        %v1758 = vmul.u32 %v1752, %v1754
        %v1759 = vshll.u32 %v1756, 16
        %v1760 = vshrl.u32 %v1756, 16
        %v1761 = vshll.u32 %v1757, 16
        %v1762 = vshrl.u32 %v1757, 16
        %vm1763 = vc.u32 %v1755, %v1759
        %v1764 = vsel %vm1763, 1, 0
        %v1765 = vadd.s32 %v1755, %v1759
        %v1766 = vadd.s32 %v1758, %v1764
        %vm1767 = vc.u32 %v1765, %v1761
        %v1768 = vsel %vm1767, 1, 0
        %v1769 = vadd.s32 %v1765, %v1761
        %v1770 = vadd.s32 %v1766, %v1768
        %v1771 = vadd.s32 %v1770, %v1760
        %v1772 = vadd.s32 %v1771, %v1762
        %v1773 = vand.u32 %v1750, 65535
        %v1774 = vshrl.u32 %v1750, 16
        %v1775 = vand.u32 %v1745, 65535
        %v1776 = vshrl.u32 %v1745, 16
        %v1777 = vmul.u32 %v1773, %v1775
        %v1778 = vmul.u32 %v1773, %v1776
        %v1779 = vmul.u32 %v1774, %v1775
        %v1780 = vmul.u32 %v1774, %v1776
        %v1781 = vshll.u32 %v1778, 16
        %v1782 = vshrl.u32 %v1778, 16
        %v1783 = vshll.u32 %v1779, 16
        %v1784 = vshrl.u32 %v1779, 16
        %vm1785 = vc.u32 %v1777, %v1781
        %v1786 = vsel %vm1785, 1, 0
        %v1787 = vadd.s32 %v1777, %v1781
        %v1788 = vadd.s32 %v1780, %v1786
        %vm1789 = vc.u32 %v1787, %v1783
        %v1790 = vsel %vm1789, 1, 0
        %v1791 = vadd.s32 %v1787, %v1783
        %v1792 = vadd.s32 %v1788, %v1790
        %v1793 = vadd.s32 %v1792, %v1782
        %v1794 = vadd.s32 %v1793, %v1784
        %v1795 = vmul.u32 %v1750, %v1741
        %v1796 = vadd.s32 %v1772, %v1791
        %vm1797 = vc.u32 %v1772, %v1791
        %v1798 = vadd.s32 %v1794, 1
        %v1799 = vsel %vm1797, %v1798, %v1794
        %v1800 = vadd.s32 %v1795, %v1799
        %v1801 = vadd.s32 %v1800, 536870912
        %v1802 = vshrl.u32 %v1801, 30
        %v1803 = vshll.u32 %v1802, 30
        %v1804 = vsub.s32 %v1800, %v1803
        %vm1805 = vcmp.lt.s32.totalorder %v1804, 0
        %v1806 = vsub.s32 0, %v1804
        %v1807 = vsel %vm1805, %v1806, %v1804
        %v1808 = vclz %v1807
        %v1809 = vsub.s32 %v1808, 2
        %vm1810 = vcmp.gt.s32.totalorder 0, %v1809
        %v1811 = vsel %vm1810, 0, %v1809
        %v1812 = vsub.s32 32, %v1811
        %v1813 = vshll.u32 %v1804, %v1811
        %v1814 = vshrl.u32 %v1796, %v1812
        %v1815 = vor.u32 %v1813, %v1814
        %v1816 = vsub.s32 4294967266, %v1811
        %v1817 = vadd.s32 %v1816, 127
        %v1818 = vshll.u32 %v1817, 23
        %v1819 = vor.u32 4788187, %v1818
        %v1820 = vand.u32 2147483647, %v1819
        %v1822 = vcvt.s32.f32 %v1815
        %v1823 = vmul.f32 %v1822, %v1820
        %v1824 = vxor.u32 %v1823, 2147483648
        %v1825 = vsel %vm1704, %v1824, %v1823
        %v1826 = vsub.s32 4, %v1802
        %v1827 = vsel %vm1704, %v1826, %v1802
        %v1828 = vsel %vm1703, %v290, %v1825
        %v1829 = vsel %vm1703, 0, %v1827
        %v1830 = vmul.f32 %v1828, %v1828
        %v1831 = vmul.f32 %v1830, -0.001358992
        %v1832 = vadd.f32 %v1831, 0.041655596
        %v1833 = vmul.f32 %v1830, %v1832
        %v1834 = vadd.f32 %v1833, -0.4999988
        %v1835 = vmul.f32 %v1830, %v1834
        %v1836 = vadd.f32 1.0, %v1835
        %v1837 = vmul.f32 %v1828, %v1828
        %v1838 = vmul.f32 %v1837, -0.00019511016
        %v1839 = vadd.f32 %v1838, 0.008332121
        %v1840 = vmul.f32 %v1837, %v1839
        %v1841 = vadd.f32 %v1840, -0.16666654
        %v1842 = vmul.f32 %v1837, %v1841
        %v1843 = vadd.f32 %v1842, 1.0
        %v1844 = vmul.f32 %v1843, %v1828
        %vm1845 = vweird.f32 %v290
        %v1846 = vadd.s32 %v1829, 3
        %v1847 = vand.u32 %v1846, 3
        %vm1848 = vcmp.lt.s32.totalorder %v1847, 2
        %vm1849 = vcmp.eq.s32.totalorder %v1847, 0
        %v1850 = vxor.u32 %v1844, 2147483648
        %v1851 = vsel %vm1849, %v1836, %v1850
        %vm1852 = vcmp.eq.s32.totalorder %v1847, 2
        %v1853 = vxor.u32 %v1836, 2147483648
        %v1854 = vsel %vm1852, %v1853, %v1844
        %v1855 = vsel %vm1848, %v1851, %v1854
        %v1856 = vsel %vm1845, nan, %v1855
        %v1857 = vand.u32 2147483647, %v293
        %vm1858 = vcmp.le.f32.partialorder %v1857, 0.7853982
        %vm1859 = vcmp.lt.s32.totalorder %v293, 0
        %v1860 = vand.u32 %v293, 2139095040
        %v1861 = vshrl.u32 %v1860, 23
        %v1862 = vsub.s32 %v1861, 127
        %v1863 = vand.u32 2147483647, %v293
        %v1864 = vand.u32 %v1863, 8388607
        %v1865 = vor.u32 %v1864, 8388608
        %v1866 = vsub.s32 0, %v1865
        %v1867 = vadd.s32 %v1862, 1
        %vm1868 = vcmp.gt.s32.totalorder %v1867, 0
        %v1869 = vsel %vm1868, %v1867, 0
        %v1870 = vshrl.u32 %v1869, 5
        %v1871 = vand.u32 %v1869, 31
        %v1872 = vsub.s32 32, %v1871
        %v1873 = vshrl.u32 683565275, %v1872
        %v1874 = vshll.u32 683565275, %v1871
        %v1875 = vshrl.u32 2475754826, %v1872
        %v1876 = vor.u32 %v1874, %v1875
        %v1877 = vshll.u32 2475754826, %v1871
        %v1878 = vshrl.u32 2131351028, %v1872
        %v1879 = vor.u32 %v1877, %v1878
        %v1880 = vshll.u32 2131351028, %v1871
        %v1881 = vshrl.u32 2102212464, %v1872
        %v1882 = vor.u32 %v1880, %v1881
        %v1883 = vshll.u32 2102212464, %v1871
        %v1884 = vshrl.u32 920167782, %v1872
        %v1885 = vor.u32 %v1883, %v1884
        %v1886 = vshll.u32 920167782, %v1871
        %v1887 = vshrl.u32 1326507024, %v1872
        %v1888 = vor.u32 %v1886, %v1887
        %vm1889 = vcmp.lt.s32.totalorder %v1870, 1
        %vm1890 = vcmp.lt.s32.totalorder %v1870, 2
        %vm1891 = vcmp.lt.s32.totalorder %v1870, 3
        %vm1892 = vcmp.lt.s32.totalorder %v1870, 4
        %v1893 = vsel %vm1889, %v1873, %v1876
        %v1894 = vsel %vm1892, %v1882, 2102212464
        %v1895 = vsel %vm1891, %v1879, %v1894
        %v1896 = vsel %vm1890, %v1893, %v1895
        %v1897 = vsel %vm1889, %v1876, %v1879
        %v1898 = vsel %vm1892, %v1885, 920167782
        %v1899 = vsel %vm1891, %v1882, %v1898
        %v1900 = vsel %vm1890, %v1897, %v1899
        %v1901 = vsel %vm1889, %v1879, %v1882
        %v1902 = vsel %vm1892, %v1888, 1326507024
        %v1903 = vsel %vm1891, %v1885, %v1902
        %v1904 = vsel %vm1890, %v1901, %v1903
        %v1905 = vshll.u32 %v1865, 8
        %v1906 = vand.u32 %v1905, 65535
        %v1907 = vshrl.u32 %v1905, 16
        %v1908 = vand.u32 %v1904, 65535
        %v1909 = vshrl.u32 %v1904, 16
        %v1910 = vmul.u32 %v1906, %v1908
        %v1911 = vmul.u32 %v1906, %v1909
        %v1912 = vmul.u32 %v1907, %v1908
        %v1913 = vmul.u32 %v1907, %v1909
        %v1914 = vshll.u32 %v1911, 16
        %v1915 = vshrl.u32 %v1911, 16
        %v1916 = vshll.u32 %v1912, 16
        %v1917 = vshrl.u32 %v1912, 16
        %vm1918 = vc.u32 %v1910, %v1914
        %v1919 = vsel %vm1918, 1, 0
        %v1920 = vadd.s32 %v1910, %v1914
        %v1921 = vadd.s32 %v1913, %v1919
        %vm1922 = vc.u32 %v1920, %v1916
        %v1923 = vsel %vm1922, 1, 0
        %v1924 = vadd.s32 %v1920, %v1916
        %v1925 = vadd.s32 %v1921, %v1923
        %v1926 = vadd.s32 %v1925, %v1915
        %v1927 = vadd.s32 %v1926, %v1917
        %v1928 = vand.u32 %v1905, 65535
        %v1929 = vshrl.u32 %v1905, 16
        %v1930 = vand.u32 %v1900, 65535
        %v1931 = vshrl.u32 %v1900, 16
        %v1932 = vmul.u32 %v1928, %v1930
        %v1933 = vmul.u32 %v1928, %v1931
        %v1934 = vmul.u32 %v1929, %v1930
        %v1935 = vmul.u32 %v1929, %v1931
        %v1936 = vshll.u32 %v1933, 16
        %v1937 = vshrl.u32 %v1933, 16
        %v1938 = vshll.u32 %v1934, 16
        %v1939 = vshrl.u32 %v1934, 16
        %vm1940 = vc.u32 %v1932, %v1936
        %v1941 = vsel %vm1940, 1, 0
        %v1942 = vadd.s32 %v1932, %v1936
        %v1943 = vadd.s32 %v1935, %v1941
        %vm1944 = vc.u32 %v1942, %v1938
        %v1945 = vsel %vm1944, 1, 0
        %v1946 = vadd.s32 %v1942, %v1938
        %v1947 = vadd.s32 %v1943, %v1945
        %v1948 = vadd.s32 %v1947, %v1937
        %v1949 = vadd.s32 %v1948, %v1939
        %v1950 = vmul.u32 %v1905, %v1896
        %v1951 = vadd.s32 %v1927, %v1946
        %vm1952 = vc.u32 %v1927, %v1946
        %v1953 = vadd.s32 %v1949, 1
        %v1954 = vsel %vm1952, %v1953, %v1949
        %v1955 = vadd.s32 %v1950, %v1954
        %v1956 = vadd.s32 %v1955, 536870912
        %v1957 = vshrl.u32 %v1956, 30
        %v1958 = vshll.u32 %v1957, 30
        %v1959 = vsub.s32 %v1955, %v1958
        %vm1960 = vcmp.lt.s32.totalorder %v1959, 0
        %v1961 = vsub.s32 0, %v1959
        %v1962 = vsel %vm1960, %v1961, %v1959
        %v1963 = vclz %v1962
        %v1964 = vsub.s32 %v1963, 2
        %vm1965 = vcmp.gt.s32.totalorder 0, %v1964
        %v1966 = vsel %vm1965, 0, %v1964
        %v1967 = vsub.s32 32, %v1966
        %v1968 = vshll.u32 %v1959, %v1966
        %v1969 = vshrl.u32 %v1951, %v1967
        %v1970 = vor.u32 %v1968, %v1969
        %v1971 = vsub.s32 4294967266, %v1966
        %v1972 = vadd.s32 %v1971, 127
        %v1973 = vshll.u32 %v1972, 23
        %v1974 = vor.u32 4788187, %v1973
        %v1975 = vand.u32 2147483647, %v1974
        %v1977 = vcvt.s32.f32 %v1970
        %v1978 = vmul.f32 %v1977, %v1975
        %v1979 = vxor.u32 %v1978, 2147483648
        %v1980 = vsel %vm1859, %v1979, %v1978
        %v1981 = vsub.s32 4, %v1957
        %v1982 = vsel %vm1859, %v1981, %v1957
        %v1983 = vsel %vm1858, %v293, %v1980
        %v1984 = vsel %vm1858, 0, %v1982
        %v1985 = vmul.f32 %v1983, %v1983
        %v1986 = vmul.f32 %v1985, -0.001358992
        %v1987 = vadd.f32 %v1986, 0.041655596
        %v1988 = vmul.f32 %v1985, %v1987
        %v1989 = vadd.f32 %v1988, -0.4999988
        %v1990 = vmul.f32 %v1985, %v1989
        %v1991 = vadd.f32 1.0, %v1990
        %v1992 = vmul.f32 %v1983, %v1983
        %v1993 = vmul.f32 %v1992, -0.00019511016
        %v1994 = vadd.f32 %v1993, 0.008332121
        %v1995 = vmul.f32 %v1992, %v1994
        %v1996 = vadd.f32 %v1995, -0.16666654
        %v1997 = vmul.f32 %v1992, %v1996
        %v1998 = vadd.f32 %v1997, 1.0
        %v1999 = vmul.f32 %v1998, %v1983
        %vm2000 = vweird.f32 %v293
        %v2001 = vadd.s32 %v1984, 3
        %v2002 = vand.u32 %v2001, 3
        %vm2003 = vcmp.lt.s32.totalorder %v2002, 2
        %vm2004 = vcmp.eq.s32.totalorder %v2002, 0
        %v2005 = vxor.u32 %v1999, 2147483648
        %v2006 = vsel %vm2004, %v1991, %v2005
        %vm2007 = vcmp.eq.s32.totalorder %v2002, 2
        %v2008 = vxor.u32 %v1991, 2147483648
        %v2009 = vsel %vm2007, %v2008, %v1999
        %v2010 = vsel %vm2003, %v2006, %v2009
        %v2011 = vsel %vm2000, nan, %v2010
        %v2012 = vand.u32 2147483647, %v295
        %vm2013 = vcmp.le.f32.partialorder %v2012, 0.7853982
        %vm2014 = vcmp.lt.s32.totalorder %v295, 0
        %v2015 = vand.u32 %v295, 2139095040
        %v2016 = vshrl.u32 %v2015, 23
        %v2017 = vsub.s32 %v2016, 127
        %v2018 = vand.u32 2147483647, %v295
        %v2019 = vand.u32 %v2018, 8388607
        %v2020 = vor.u32 %v2019, 8388608
        %v2021 = vsub.s32 0, %v2020
        %v2022 = vadd.s32 %v2017, 1
        %vm2023 = vcmp.gt.s32.totalorder %v2022, 0
        %v2024 = vsel %vm2023, %v2022, 0
        %v2025 = vshrl.u32 %v2024, 5
        %v2026 = vand.u32 %v2024, 31
        %v2027 = vsub.s32 32, %v2026
        %v2028 = vshrl.u32 683565275, %v2027
        %v2029 = vshll.u32 683565275, %v2026
        %v2030 = vshrl.u32 2475754826, %v2027
        %v2031 = vor.u32 %v2029, %v2030
        %v2032 = vshll.u32 2475754826, %v2026
        %v2033 = vshrl.u32 2131351028, %v2027
        %v2034 = vor.u32 %v2032, %v2033
        %v2035 = vshll.u32 2131351028, %v2026
        %v2036 = vshrl.u32 2102212464, %v2027
        %v2037 = vor.u32 %v2035, %v2036
        %v2038 = vshll.u32 2102212464, %v2026
        %v2039 = vshrl.u32 920167782, %v2027
        %v2040 = vor.u32 %v2038, %v2039
        %v2041 = vshll.u32 920167782, %v2026
        %v2042 = vshrl.u32 1326507024, %v2027
        %v2043 = vor.u32 %v2041, %v2042
        %vm2044 = vcmp.lt.s32.totalorder %v2025, 1
        %vm2045 = vcmp.lt.s32.totalorder %v2025, 2
        %vm2046 = vcmp.lt.s32.totalorder %v2025, 3
        %vm2047 = vcmp.lt.s32.totalorder %v2025, 4
        %v2048 = vsel %vm2044, %v2028, %v2031
        %v2049 = vsel %vm2047, %v2037, 2102212464
        %v2050 = vsel %vm2046, %v2034, %v2049
        %v2051 = vsel %vm2045, %v2048, %v2050
        %v2052 = vsel %vm2044, %v2031, %v2034
        %v2053 = vsel %vm2047, %v2040, 920167782
        %v2054 = vsel %vm2046, %v2037, %v2053
        %v2055 = vsel %vm2045, %v2052, %v2054
        %v2056 = vsel %vm2044, %v2034, %v2037
        %v2057 = vsel %vm2047, %v2043, 1326507024
        %v2058 = vsel %vm2046, %v2040, %v2057
        %v2059 = vsel %vm2045, %v2056, %v2058
        %v2060 = vshll.u32 %v2020, 8
        %v2061 = vand.u32 %v2060, 65535
        %v2062 = vshrl.u32 %v2060, 16
        %v2063 = vand.u32 %v2059, 65535
        %v2064 = vshrl.u32 %v2059, 16
        %v2065 = vmul.u32 %v2061, %v2063
        %v2066 = vmul.u32 %v2061, %v2064
        %v2067 = vmul.u32 %v2062, %v2063
        %v2068 = vmul.u32 %v2062, %v2064
        %v2069 = vshll.u32 %v2066, 16
        %v2070 = vshrl.u32 %v2066, 16
        %v2071 = vshll.u32 %v2067, 16
        %v2072 = vshrl.u32 %v2067, 16
        %vm2073 = vc.u32 %v2065, %v2069
        %v2074 = vsel %vm2073, 1, 0
        %v2075 = vadd.s32 %v2065, %v2069
        %v2076 = vadd.s32 %v2068, %v2074
        %vm2077 = vc.u32 %v2075, %v2071
        %v2078 = vsel %vm2077, 1, 0
        %v2079 = vadd.s32 %v2075, %v2071
        %v2080 = vadd.s32 %v2076, %v2078
        %v2081 = vadd.s32 %v2080, %v2070
        %v2082 = vadd.s32 %v2081, %v2072
        %v2083 = vand.u32 %v2060, 65535
        %v2084 = vshrl.u32 %v2060, 16
        %v2085 = vand.u32 %v2055, 65535
        %v2086 = vshrl.u32 %v2055, 16
        %v2087 = vmul.u32 %v2083, %v2085
        %v2088 = vmul.u32 %v2083, %v2086
        %v2089 = vmul.u32 %v2084, %v2085
        %v2090 = vmul.u32 %v2084, %v2086
        %v2091 = vshll.u32 %v2088, 16
        %v2092 = vshrl.u32 %v2088, 16
        %v2093 = vshll.u32 %v2089, 16
        %v2094 = vshrl.u32 %v2089, 16
        %vm2095 = vc.u32 %v2087, %v2091
        %v2096 = vsel %vm2095, 1, 0
        %v2097 = vadd.s32 %v2087, %v2091
        %v2098 = vadd.s32 %v2090, %v2096
        %vm2099 = vc.u32 %v2097, %v2093
        %v2100 = vsel %vm2099, 1, 0
        %v2101 = vadd.s32 %v2097, %v2093
        %v2102 = vadd.s32 %v2098, %v2100
        %v2103 = vadd.s32 %v2102, %v2092
        %v2104 = vadd.s32 %v2103, %v2094
        %v2105 = vmul.u32 %v2060, %v2051
        %v2106 = vadd.s32 %v2082, %v2101
        %vm2107 = vc.u32 %v2082, %v2101
        %v2108 = vadd.s32 %v2104, 1
        %v2109 = vsel %vm2107, %v2108, %v2104
        %v2110 = vadd.s32 %v2105, %v2109
        %v2111 = vadd.s32 %v2110, 536870912
        %v2112 = vshrl.u32 %v2111, 30
        %v2113 = vshll.u32 %v2112, 30
        %v2114 = vsub.s32 %v2110, %v2113
        %vm2115 = vcmp.lt.s32.totalorder %v2114, 0
        %v2116 = vsub.s32 0, %v2114
        %v2117 = vsel %vm2115, %v2116, %v2114
        %v2118 = vclz %v2117
        %v2119 = vsub.s32 %v2118, 2
        %vm2120 = vcmp.gt.s32.totalorder 0, %v2119
        %v2121 = vsel %vm2120, 0, %v2119
        %v2122 = vsub.s32 32, %v2121
        %v2123 = vshll.u32 %v2114, %v2121
        %v2124 = vshrl.u32 %v2106, %v2122
        %v2125 = vor.u32 %v2123, %v2124
        %v2126 = vsub.s32 4294967266, %v2121
        %v2127 = vadd.s32 %v2126, 127
        %v2128 = vshll.u32 %v2127, 23
        %v2129 = vor.u32 4788187, %v2128
        %v2130 = vand.u32 2147483647, %v2129
        %v2132 = vcvt.s32.f32 %v2125
        %v2133 = vmul.f32 %v2132, %v2130
        %v2134 = vxor.u32 %v2133, 2147483648
        %v2135 = vsel %vm2014, %v2134, %v2133
        %v2136 = vsub.s32 4, %v2112
        %v2137 = vsel %vm2014, %v2136, %v2112
        %v2138 = vsel %vm2013, %v295, %v2135
        %v2139 = vsel %vm2013, 0, %v2137
        %v2140 = vmul.f32 %v2138, %v2138
        %v2141 = vmul.f32 %v2140, -0.001358992
        %v2142 = vadd.f32 %v2141, 0.041655596
        %v2143 = vmul.f32 %v2140, %v2142
        %v2144 = vadd.f32 %v2143, -0.4999988
        %v2145 = vmul.f32 %v2140, %v2144
        %v2146 = vadd.f32 1.0, %v2145
        %v2147 = vmul.f32 %v2138, %v2138
        %v2148 = vmul.f32 %v2147, -0.00019511016
        %v2149 = vadd.f32 %v2148, 0.008332121
        %v2150 = vmul.f32 %v2147, %v2149
        %v2151 = vadd.f32 %v2150, -0.16666654
        %v2152 = vmul.f32 %v2147, %v2151
        %v2153 = vadd.f32 %v2152, 1.0
        %v2154 = vmul.f32 %v2153, %v2138
        %vm2155 = vweird.f32 %v295
        %v2156 = vadd.s32 %v2139, 3
        %v2157 = vand.u32 %v2156, 3
        %vm2158 = vcmp.lt.s32.totalorder %v2157, 2
        %vm2159 = vcmp.eq.s32.totalorder %v2157, 0
        %v2160 = vxor.u32 %v2154, 2147483648
        %v2161 = vsel %vm2159, %v2146, %v2160
        %vm2162 = vcmp.eq.s32.totalorder %v2157, 2
        %v2163 = vxor.u32 %v2146, 2147483648
        %v2164 = vsel %vm2162, %v2163, %v2154
        %v2165 = vsel %vm2158, %v2161, %v2164
        %v2166 = vsel %vm2155, nan, %v2165
        %v2167 = vand.u32 2147483647, %v298
        %vm2168 = vcmp.le.f32.partialorder %v2167, 0.7853982
        %vm2169 = vcmp.lt.s32.totalorder %v298, 0
        %v2170 = vand.u32 %v298, 2139095040
        %v2171 = vshrl.u32 %v2170, 23
        %v2172 = vsub.s32 %v2171, 127
        %v2173 = vand.u32 2147483647, %v298
        %v2174 = vand.u32 %v2173, 8388607
        %v2175 = vor.u32 %v2174, 8388608
        %v2176 = vsub.s32 0, %v2175
        %v2177 = vadd.s32 %v2172, 1
        %vm2178 = vcmp.gt.s32.totalorder %v2177, 0
        %v2179 = vsel %vm2178, %v2177, 0
        %v2180 = vshrl.u32 %v2179, 5
        %v2181 = vand.u32 %v2179, 31
        %v2182 = vsub.s32 32, %v2181
        %v2183 = vshrl.u32 683565275, %v2182
        %v2184 = vshll.u32 683565275, %v2181
        %v2185 = vshrl.u32 2475754826, %v2182
        %v2186 = vor.u32 %v2184, %v2185
        %v2187 = vshll.u32 2475754826, %v2181
        %v2188 = vshrl.u32 2131351028, %v2182
        %v2189 = vor.u32 %v2187, %v2188
        %v2190 = vshll.u32 2131351028, %v2181
        %v2191 = vshrl.u32 2102212464, %v2182
        %v2192 = vor.u32 %v2190, %v2191
        %v2193 = vshll.u32 2102212464, %v2181
        %v2194 = vshrl.u32 920167782, %v2182
        %v2195 = vor.u32 %v2193, %v2194
        %v2196 = vshll.u32 920167782, %v2181
        %v2197 = vshrl.u32 1326507024, %v2182
        %v2198 = vor.u32 %v2196, %v2197
        %vm2199 = vcmp.lt.s32.totalorder %v2180, 1
        %vm2200 = vcmp.lt.s32.totalorder %v2180, 2
        %vm2201 = vcmp.lt.s32.totalorder %v2180, 3
        %vm2202 = vcmp.lt.s32.totalorder %v2180, 4
        %v2203 = vsel %vm2199, %v2183, %v2186
        %v2204 = vsel %vm2202, %v2192, 2102212464
        %v2205 = vsel %vm2201, %v2189, %v2204
        %v2206 = vsel %vm2200, %v2203, %v2205
        %v2207 = vsel %vm2199, %v2186, %v2189
        %v2208 = vsel %vm2202, %v2195, 920167782
        %v2209 = vsel %vm2201, %v2192, %v2208
        %v2210 = vsel %vm2200, %v2207, %v2209
        %v2211 = vsel %vm2199, %v2189, %v2192
        %v2212 = vsel %vm2202, %v2198, 1326507024
        %v2213 = vsel %vm2201, %v2195, %v2212
        %v2214 = vsel %vm2200, %v2211, %v2213
        %v2215 = vshll.u32 %v2175, 8
        %v2216 = vand.u32 %v2215, 65535
        %v2217 = vshrl.u32 %v2215, 16
        %v2218 = vand.u32 %v2214, 65535
        %v2219 = vshrl.u32 %v2214, 16
        %v2220 = vmul.u32 %v2216, %v2218
        %v2221 = vmul.u32 %v2216, %v2219
        %v2222 = vmul.u32 %v2217, %v2218
        %v2223 = vmul.u32 %v2217, %v2219
        %v2224 = vshll.u32 %v2221, 16
        %v2225 = vshrl.u32 %v2221, 16
        %v2226 = vshll.u32 %v2222, 16
        %v2227 = vshrl.u32 %v2222, 16
        %vm2228 = vc.u32 %v2220, %v2224
        %v2229 = vsel %vm2228, 1, 0
        %v2230 = vadd.s32 %v2220, %v2224
        %v2231 = vadd.s32 %v2223, %v2229
        %vm2232 = vc.u32 %v2230, %v2226
        %v2233 = vsel %vm2232, 1, 0
        %v2234 = vadd.s32 %v2230, %v2226
        %v2235 = vadd.s32 %v2231, %v2233
        %v2236 = vadd.s32 %v2235, %v2225
        %v2237 = vadd.s32 %v2236, %v2227
        %v2238 = vand.u32 %v2215, 65535
        %v2239 = vshrl.u32 %v2215, 16
        %v2240 = vand.u32 %v2210, 65535
        %v2241 = vshrl.u32 %v2210, 16
        %v2242 = vmul.u32 %v2238, %v2240
        %v2243 = vmul.u32 %v2238, %v2241
        %v2244 = vmul.u32 %v2239, %v2240
        %v2245 = vmul.u32 %v2239, %v2241
        %v2246 = vshll.u32 %v2243, 16
        %v2247 = vshrl.u32 %v2243, 16
        %v2248 = vshll.u32 %v2244, 16
        %v2249 = vshrl.u32 %v2244, 16
        %vm2250 = vc.u32 %v2242, %v2246
        %v2251 = vsel %vm2250, 1, 0
        %v2252 = vadd.s32 %v2242, %v2246
        %v2253 = vadd.s32 %v2245, %v2251
        %vm2254 = vc.u32 %v2252, %v2248
        %v2255 = vsel %vm2254, 1, 0
        %v2256 = vadd.s32 %v2252, %v2248
        %v2257 = vadd.s32 %v2253, %v2255
        %v2258 = vadd.s32 %v2257, %v2247
        %v2259 = vadd.s32 %v2258, %v2249
        %v2260 = vmul.u32 %v2215, %v2206
        %v2261 = vadd.s32 %v2237, %v2256
        %vm2262 = vc.u32 %v2237, %v2256
        %v2263 = vadd.s32 %v2259, 1
        %v2264 = vsel %vm2262, %v2263, %v2259
        %v2265 = vadd.s32 %v2260, %v2264
        %v2266 = vadd.s32 %v2265, 536870912
        %v2267 = vshrl.u32 %v2266, 30
        %v2268 = vshll.u32 %v2267, 30
        %v2269 = vsub.s32 %v2265, %v2268
        %vm2270 = vcmp.lt.s32.totalorder %v2269, 0
        %v2271 = vsub.s32 0, %v2269
        %v2272 = vsel %vm2270, %v2271, %v2269
        %v2273 = vclz %v2272
        %v2274 = vsub.s32 %v2273, 2
        %vm2275 = vcmp.gt.s32.totalorder 0, %v2274
        %v2276 = vsel %vm2275, 0, %v2274
        %v2277 = vsub.s32 32, %v2276
        %v2278 = vshll.u32 %v2269, %v2276
        %v2279 = vshrl.u32 %v2261, %v2277
        %v2280 = vor.u32 %v2278, %v2279
        %v2281 = vsub.s32 4294967266, %v2276
        %v2282 = vadd.s32 %v2281, 127
        %v2283 = vshll.u32 %v2282, 23
        %v2284 = vor.u32 4788187, %v2283
        %v2285 = vand.u32 2147483647, %v2284
        %v2287 = vcvt.s32.f32 %v2280
        %v2288 = vmul.f32 %v2287, %v2285
        %v2289 = vxor.u32 %v2288, 2147483648
        %v2290 = vsel %vm2169, %v2289, %v2288
        %v2291 = vsub.s32 4, %v2267
        %v2292 = vsel %vm2169, %v2291, %v2267
        %v2293 = vsel %vm2168, %v298, %v2290
        %v2294 = vsel %vm2168, 0, %v2292
        %v2295 = vmul.f32 %v2293, %v2293
        %v2296 = vmul.f32 %v2295, -0.001358992
        %v2297 = vadd.f32 %v2296, 0.041655596
        %v2298 = vmul.f32 %v2295, %v2297
        %v2299 = vadd.f32 %v2298, -0.4999988
        %v2300 = vmul.f32 %v2295, %v2299
        %v2301 = vadd.f32 1.0, %v2300
        %v2302 = vmul.f32 %v2293, %v2293
        %v2303 = vmul.f32 %v2302, -0.00019511016
        %v2304 = vadd.f32 %v2303, 0.008332121
        %v2305 = vmul.f32 %v2302, %v2304
        %v2306 = vadd.f32 %v2305, -0.16666654
        %v2307 = vmul.f32 %v2302, %v2306
        %v2308 = vadd.f32 %v2307, 1.0
        %v2309 = vmul.f32 %v2308, %v2293
        %vm2310 = vweird.f32 %v298
        %v2311 = vadd.s32 %v2294, 3
        %v2312 = vand.u32 %v2311, 3
        %vm2313 = vcmp.lt.s32.totalorder %v2312, 2
        %vm2314 = vcmp.eq.s32.totalorder %v2312, 0
        %v2315 = vxor.u32 %v2309, 2147483648
        %v2316 = vsel %vm2314, %v2301, %v2315
        %vm2317 = vcmp.eq.s32.totalorder %v2312, 2
        %v2318 = vxor.u32 %v2301, 2147483648
        %v2319 = vsel %vm2317, %v2318, %v2309
        %v2320 = vsel %vm2313, %v2316, %v2319
        %v2321 = vsel %vm2310, nan, %v2320
        %v2322 = vand.u32 2147483647, %v300
        %vm2323 = vcmp.le.f32.partialorder %v2322, 0.7853982
        %vm2324 = vcmp.lt.s32.totalorder %v300, 0
        %v2325 = vand.u32 %v300, 2139095040
        %v2326 = vshrl.u32 %v2325, 23
        %v2327 = vsub.s32 %v2326, 127
        %v2328 = vand.u32 2147483647, %v300
        %v2329 = vand.u32 %v2328, 8388607
        %v2330 = vor.u32 %v2329, 8388608
        %v2331 = vsub.s32 0, %v2330
        %v2332 = vadd.s32 %v2327, 1
        %vm2333 = vcmp.gt.s32.totalorder %v2332, 0
        %v2334 = vsel %vm2333, %v2332, 0
        %v2335 = vshrl.u32 %v2334, 5
        %v2336 = vand.u32 %v2334, 31
        %v2337 = vsub.s32 32, %v2336
        %v2338 = vshrl.u32 683565275, %v2337
        %v2339 = vshll.u32 683565275, %v2336
        %v2340 = vshrl.u32 2475754826, %v2337
        %v2341 = vor.u32 %v2339, %v2340
        %v2342 = vshll.u32 2475754826, %v2336
        %v2343 = vshrl.u32 2131351028, %v2337
        %v2344 = vor.u32 %v2342, %v2343
        %v2345 = vshll.u32 2131351028, %v2336
        %v2346 = vshrl.u32 2102212464, %v2337
        %v2347 = vor.u32 %v2345, %v2346
        %v2348 = vshll.u32 2102212464, %v2336
        %v2349 = vshrl.u32 920167782, %v2337
        %v2350 = vor.u32 %v2348, %v2349
        %v2351 = vshll.u32 920167782, %v2336
        %v2352 = vshrl.u32 1326507024, %v2337
        %v2353 = vor.u32 %v2351, %v2352
        %vm2354 = vcmp.lt.s32.totalorder %v2335, 1
        %vm2355 = vcmp.lt.s32.totalorder %v2335, 2
        %vm2356 = vcmp.lt.s32.totalorder %v2335, 3
        %vm2357 = vcmp.lt.s32.totalorder %v2335, 4
        %v2358 = vsel %vm2354, %v2338, %v2341
        %v2359 = vsel %vm2357, %v2347, 2102212464
        %v2360 = vsel %vm2356, %v2344, %v2359
        %v2361 = vsel %vm2355, %v2358, %v2360
        %v2362 = vsel %vm2354, %v2341, %v2344
        %v2363 = vsel %vm2357, %v2350, 920167782
        %v2364 = vsel %vm2356, %v2347, %v2363
        %v2365 = vsel %vm2355, %v2362, %v2364
        %v2366 = vsel %vm2354, %v2344, %v2347
        %v2367 = vsel %vm2357, %v2353, 1326507024
        %v2368 = vsel %vm2356, %v2350, %v2367
        %v2369 = vsel %vm2355, %v2366, %v2368
        %v2370 = vshll.u32 %v2330, 8
        %v2371 = vand.u32 %v2370, 65535
        %v2372 = vshrl.u32 %v2370, 16
        %v2373 = vand.u32 %v2369, 65535
        %v2374 = vshrl.u32 %v2369, 16
        %v2375 = vmul.u32 %v2371, %v2373
        %v2376 = vmul.u32 %v2371, %v2374
        %v2377 = vmul.u32 %v2372, %v2373
        %v2378 = vmul.u32 %v2372, %v2374
        %v2379 = vshll.u32 %v2376, 16
        %v2380 = vshrl.u32 %v2376, 16
        %v2381 = vshll.u32 %v2377, 16
        %v2382 = vshrl.u32 %v2377, 16
        %vm2383 = vc.u32 %v2375, %v2379
        %v2384 = vsel %vm2383, 1, 0
        %v2385 = vadd.s32 %v2375, %v2379
        %v2386 = vadd.s32 %v2378, %v2384
        %vm2387 = vc.u32 %v2385, %v2381
        %v2388 = vsel %vm2387, 1, 0
        %v2389 = vadd.s32 %v2385, %v2381
        %v2390 = vadd.s32 %v2386, %v2388
        %v2391 = vadd.s32 %v2390, %v2380
        %v2392 = vadd.s32 %v2391, %v2382
        %v2393 = vand.u32 %v2370, 65535
        %v2394 = vshrl.u32 %v2370, 16
        %v2395 = vand.u32 %v2365, 65535
        %v2396 = vshrl.u32 %v2365, 16
        %v2397 = vmul.u32 %v2393, %v2395
        %v2398 = vmul.u32 %v2393, %v2396
        %v2399 = vmul.u32 %v2394, %v2395
        %v2400 = vmul.u32 %v2394, %v2396
        %v2401 = vshll.u32 %v2398, 16
        %v2402 = vshrl.u32 %v2398, 16
        %v2403 = vshll.u32 %v2399, 16
        %v2404 = vshrl.u32 %v2399, 16
        %vm2405 = vc.u32 %v2397, %v2401
        %v2406 = vsel %vm2405, 1, 0
        %v2407 = vadd.s32 %v2397, %v2401
        %v2408 = vadd.s32 %v2400, %v2406
        %vm2409 = vc.u32 %v2407, %v2403
        %v2410 = vsel %vm2409, 1, 0
        %v2411 = vadd.s32 %v2407, %v2403
        %v2412 = vadd.s32 %v2408, %v2410
        %v2413 = vadd.s32 %v2412, %v2402
        %v2414 = vadd.s32 %v2413, %v2404
        %v2415 = vmul.u32 %v2370, %v2361
        %v2416 = vadd.s32 %v2392, %v2411
        %vm2417 = vc.u32 %v2392, %v2411
        %v2418 = vadd.s32 %v2414, 1
        %v2419 = vsel %vm2417, %v2418, %v2414
        %v2420 = vadd.s32 %v2415, %v2419
        %v2421 = vadd.s32 %v2420, 536870912
        %v2422 = vshrl.u32 %v2421, 30
        %v2423 = vshll.u32 %v2422, 30
        %v2424 = vsub.s32 %v2420, %v2423
        %vm2425 = vcmp.lt.s32.totalorder %v2424, 0
        %v2426 = vsub.s32 0, %v2424
        %v2427 = vsel %vm2425, %v2426, %v2424
        %v2428 = vclz %v2427
        %v2429 = vsub.s32 %v2428, 2
        %vm2430 = vcmp.gt.s32.totalorder 0, %v2429
        %v2431 = vsel %vm2430, 0, %v2429
        %v2432 = vsub.s32 32, %v2431
        %v2433 = vshll.u32 %v2424, %v2431
        %v2434 = vshrl.u32 %v2416, %v2432
        %v2435 = vor.u32 %v2433, %v2434
        %v2436 = vsub.s32 4294967266, %v2431
        %v2437 = vadd.s32 %v2436, 127
        %v2438 = vshll.u32 %v2437, 23
        %v2439 = vor.u32 4788187, %v2438
        %v2440 = vand.u32 2147483647, %v2439
        %v2442 = vcvt.s32.f32 %v2435
        %v2443 = vmul.f32 %v2442, %v2440
        %v2444 = vxor.u32 %v2443, 2147483648
        %v2445 = vsel %vm2324, %v2444, %v2443
        %v2446 = vsub.s32 4, %v2422
        %v2447 = vsel %vm2324, %v2446, %v2422
        %v2448 = vsel %vm2323, %v300, %v2445
        %v2449 = vsel %vm2323, 0, %v2447
        %v2450 = vmul.f32 %v2448, %v2448
        %v2451 = vmul.f32 %v2450, -0.001358992
        %v2452 = vadd.f32 %v2451, 0.041655596
        %v2453 = vmul.f32 %v2450, %v2452
        %v2454 = vadd.f32 %v2453, -0.4999988
        %v2455 = vmul.f32 %v2450, %v2454
        %v2456 = vadd.f32 1.0, %v2455
        %v2457 = vmul.f32 %v2448, %v2448
        %v2458 = vmul.f32 %v2457, -0.00019511016
        %v2459 = vadd.f32 %v2458, 0.008332121
        %v2460 = vmul.f32 %v2457, %v2459
        %v2461 = vadd.f32 %v2460, -0.16666654
        %v2462 = vmul.f32 %v2457, %v2461
        %v2463 = vadd.f32 %v2462, 1.0
        %v2464 = vmul.f32 %v2463, %v2448
        %vm2465 = vweird.f32 %v300
        %v2466 = vadd.s32 %v2449, 3
        %v2467 = vand.u32 %v2466, 3
        %vm2468 = vcmp.lt.s32.totalorder %v2467, 2
        %vm2469 = vcmp.eq.s32.totalorder %v2467, 0
        %v2470 = vxor.u32 %v2464, 2147483648
        %v2471 = vsel %vm2469, %v2456, %v2470
        %vm2472 = vcmp.eq.s32.totalorder %v2467, 2
        %v2473 = vxor.u32 %v2456, 2147483648
        %v2474 = vsel %vm2472, %v2473, %v2464
        %v2475 = vsel %vm2468, %v2471, %v2474
        %v2476 = vsel %vm2465, nan, %v2475
        %v2477 = vand.u32 2147483647, %v303
        %vm2478 = vcmp.le.f32.partialorder %v2477, 0.7853982
        %vm2479 = vcmp.lt.s32.totalorder %v303, 0
        %v2480 = vand.u32 %v303, 2139095040
        %v2481 = vshrl.u32 %v2480, 23
        %v2482 = vsub.s32 %v2481, 127
        %v2483 = vand.u32 2147483647, %v303
        %v2484 = vand.u32 %v2483, 8388607
        %v2485 = vor.u32 %v2484, 8388608
        %v2486 = vsub.s32 0, %v2485
        %v2487 = vadd.s32 %v2482, 1
        %vm2488 = vcmp.gt.s32.totalorder %v2487, 0
        %v2489 = vsel %vm2488, %v2487, 0
        %v2490 = vshrl.u32 %v2489, 5
        %v2491 = vand.u32 %v2489, 31
        %v2492 = vsub.s32 32, %v2491
        %v2493 = vshrl.u32 683565275, %v2492
        %v2494 = vshll.u32 683565275, %v2491
        %v2495 = vshrl.u32 2475754826, %v2492
        %v2496 = vor.u32 %v2494, %v2495
        %v2497 = vshll.u32 2475754826, %v2491
        %v2498 = vshrl.u32 2131351028, %v2492
        %v2499 = vor.u32 %v2497, %v2498
        %v2500 = vshll.u32 2131351028, %v2491
        %v2501 = vshrl.u32 2102212464, %v2492
        %v2502 = vor.u32 %v2500, %v2501
        %v2503 = vshll.u32 2102212464, %v2491
        %v2504 = vshrl.u32 920167782, %v2492
        %v2505 = vor.u32 %v2503, %v2504
        %v2506 = vshll.u32 920167782, %v2491
        %v2507 = vshrl.u32 1326507024, %v2492
        %v2508 = vor.u32 %v2506, %v2507
        %vm2509 = vcmp.lt.s32.totalorder %v2490, 1
        %vm2510 = vcmp.lt.s32.totalorder %v2490, 2
        %vm2511 = vcmp.lt.s32.totalorder %v2490, 3
        %vm2512 = vcmp.lt.s32.totalorder %v2490, 4
        %v2513 = vsel %vm2509, %v2493, %v2496
        %v2514 = vsel %vm2512, %v2502, 2102212464
        %v2515 = vsel %vm2511, %v2499, %v2514
        %v2516 = vsel %vm2510, %v2513, %v2515
        %v2517 = vsel %vm2509, %v2496, %v2499
        %v2518 = vsel %vm2512, %v2505, 920167782
        %v2519 = vsel %vm2511, %v2502, %v2518
        %v2520 = vsel %vm2510, %v2517, %v2519
        %v2521 = vsel %vm2509, %v2499, %v2502
        %v2522 = vsel %vm2512, %v2508, 1326507024
        %v2523 = vsel %vm2511, %v2505, %v2522
        %v2524 = vsel %vm2510, %v2521, %v2523
        %v2525 = vshll.u32 %v2485, 8
        %v2526 = vand.u32 %v2525, 65535
        %v2527 = vshrl.u32 %v2525, 16
        %v2528 = vand.u32 %v2524, 65535
        %v2529 = vshrl.u32 %v2524, 16
        %v2530 = vmul.u32 %v2526, %v2528
        %v2531 = vmul.u32 %v2526, %v2529
        %v2532 = vmul.u32 %v2527, %v2528
        %v2533 = vmul.u32 %v2527, %v2529
        %v2534 = vshll.u32 %v2531, 16
        %v2535 = vshrl.u32 %v2531, 16
        %v2536 = vshll.u32 %v2532, 16
        %v2537 = vshrl.u32 %v2532, 16
        %vm2538 = vc.u32 %v2530, %v2534
        %v2539 = vsel %vm2538, 1, 0
        %v2540 = vadd.s32 %v2530, %v2534
        %v2541 = vadd.s32 %v2533, %v2539
        %vm2542 = vc.u32 %v2540, %v2536
        %v2543 = vsel %vm2542, 1, 0
        %v2544 = vadd.s32 %v2540, %v2536
        %v2545 = vadd.s32 %v2541, %v2543
        %v2546 = vadd.s32 %v2545, %v2535
        %v2547 = vadd.s32 %v2546, %v2537
        %v2548 = vand.u32 %v2525, 65535
        %v2549 = vshrl.u32 %v2525, 16
        %v2550 = vand.u32 %v2520, 65535
        %v2551 = vshrl.u32 %v2520, 16
        %v2552 = vmul.u32 %v2548, %v2550
        %v2553 = vmul.u32 %v2548, %v2551
        %v2554 = vmul.u32 %v2549, %v2550
        %v2555 = vmul.u32 %v2549, %v2551
        %v2556 = vshll.u32 %v2553, 16
        %v2557 = vshrl.u32 %v2553, 16
        %v2558 = vshll.u32 %v2554, 16
        %v2559 = vshrl.u32 %v2554, 16
        %vm2560 = vc.u32 %v2552, %v2556
        %v2561 = vsel %vm2560, 1, 0
        %v2562 = vadd.s32 %v2552, %v2556
        %v2563 = vadd.s32 %v2555, %v2561
        %vm2564 = vc.u32 %v2562, %v2558
        %v2565 = vsel %vm2564, 1, 0
        %v2566 = vadd.s32 %v2562, %v2558
        %v2567 = vadd.s32 %v2563, %v2565
        %v2568 = vadd.s32 %v2567, %v2557
        %v2569 = vadd.s32 %v2568, %v2559
        %v2570 = vmul.u32 %v2525, %v2516
        %v2571 = vadd.s32 %v2547, %v2566
        %vm2572 = vc.u32 %v2547, %v2566
        %v2573 = vadd.s32 %v2569, 1
        %v2574 = vsel %vm2572, %v2573, %v2569
        %v2575 = vadd.s32 %v2570, %v2574
        %v2576 = vadd.s32 %v2575, 536870912
        %v2577 = vshrl.u32 %v2576, 30
        %v2578 = vshll.u32 %v2577, 30
        %v2579 = vsub.s32 %v2575, %v2578
        %vm2580 = vcmp.lt.s32.totalorder %v2579, 0
        %v2581 = vsub.s32 0, %v2579
        %v2582 = vsel %vm2580, %v2581, %v2579
        %v2583 = vclz %v2582
        %v2584 = vsub.s32 %v2583, 2
        %vm2585 = vcmp.gt.s32.totalorder 0, %v2584
        %v2586 = vsel %vm2585, 0, %v2584
        %v2587 = vsub.s32 32, %v2586
        %v2588 = vshll.u32 %v2579, %v2586
        %v2589 = vshrl.u32 %v2571, %v2587
        %v2590 = vor.u32 %v2588, %v2589
        %v2591 = vsub.s32 4294967266, %v2586
        %v2592 = vadd.s32 %v2591, 127
        %v2593 = vshll.u32 %v2592, 23
        %v2594 = vor.u32 4788187, %v2593
        %v2595 = vand.u32 2147483647, %v2594
        %v2597 = vcvt.s32.f32 %v2590
        %v2598 = vmul.f32 %v2597, %v2595
        %v2599 = vxor.u32 %v2598, 2147483648
        %v2600 = vsel %vm2479, %v2599, %v2598
        %v2601 = vsub.s32 4, %v2577
        %v2602 = vsel %vm2479, %v2601, %v2577
        %v2603 = vsel %vm2478, %v303, %v2600
        %v2604 = vsel %vm2478, 0, %v2602
        %v2605 = vmul.f32 %v2603, %v2603
        %v2606 = vmul.f32 %v2605, -0.001358992
        %v2607 = vadd.f32 %v2606, 0.041655596
        %v2608 = vmul.f32 %v2605, %v2607
        %v2609 = vadd.f32 %v2608, -0.4999988
        %v2610 = vmul.f32 %v2605, %v2609
        %v2611 = vadd.f32 1.0, %v2610
        %v2612 = vmul.f32 %v2603, %v2603
        %v2613 = vmul.f32 %v2612, -0.00019511016
        %v2614 = vadd.f32 %v2613, 0.008332121
        %v2615 = vmul.f32 %v2612, %v2614
        %v2616 = vadd.f32 %v2615, -0.16666654
        %v2617 = vmul.f32 %v2612, %v2616
        %v2618 = vadd.f32 %v2617, 1.0
        %v2619 = vmul.f32 %v2618, %v2603
        %vm2620 = vweird.f32 %v303
        %v2621 = vadd.s32 %v2604, 3
        %v2622 = vand.u32 %v2621, 3
        %vm2623 = vcmp.lt.s32.totalorder %v2622, 2
        %vm2624 = vcmp.eq.s32.totalorder %v2622, 0
        %v2625 = vxor.u32 %v2619, 2147483648
        %v2626 = vsel %vm2624, %v2611, %v2625
        %vm2627 = vcmp.eq.s32.totalorder %v2622, 2
        %v2628 = vxor.u32 %v2611, 2147483648
        %v2629 = vsel %vm2627, %v2628, %v2619
        %v2630 = vsel %vm2623, %v2626, %v2629
        %v2631 = vsel %vm2620, nan, %v2630
        %v2632 = vand.u32 2147483647, %v305
        %vm2633 = vcmp.le.f32.partialorder %v2632, 0.7853982
        %vm2634 = vcmp.lt.s32.totalorder %v305, 0
        %v2635 = vand.u32 %v305, 2139095040
        %v2636 = vshrl.u32 %v2635, 23
        %v2637 = vsub.s32 %v2636, 127
        %v2638 = vand.u32 2147483647, %v305
        %v2639 = vand.u32 %v2638, 8388607
        %v2640 = vor.u32 %v2639, 8388608
        %v2641 = vsub.s32 0, %v2640
        %v2642 = vadd.s32 %v2637, 1
        %vm2643 = vcmp.gt.s32.totalorder %v2642, 0
        %v2644 = vsel %vm2643, %v2642, 0
        %v2645 = vshrl.u32 %v2644, 5
        %v2646 = vand.u32 %v2644, 31
        %v2647 = vsub.s32 32, %v2646
        %v2648 = vshrl.u32 683565275, %v2647
        %v2649 = vshll.u32 683565275, %v2646
        %v2650 = vshrl.u32 2475754826, %v2647
        %v2651 = vor.u32 %v2649, %v2650
        %v2652 = vshll.u32 2475754826, %v2646
        %v2653 = vshrl.u32 2131351028, %v2647
        %v2654 = vor.u32 %v2652, %v2653
        %v2655 = vshll.u32 2131351028, %v2646
        %v2656 = vshrl.u32 2102212464, %v2647
        %v2657 = vor.u32 %v2655, %v2656
        %v2658 = vshll.u32 2102212464, %v2646
        %v2659 = vshrl.u32 920167782, %v2647
        %v2660 = vor.u32 %v2658, %v2659
        %v2661 = vshll.u32 920167782, %v2646
        %v2662 = vshrl.u32 1326507024, %v2647
        %v2663 = vor.u32 %v2661, %v2662
        %vm2664 = vcmp.lt.s32.totalorder %v2645, 1
        %vm2665 = vcmp.lt.s32.totalorder %v2645, 2
        %vm2666 = vcmp.lt.s32.totalorder %v2645, 3
        %vm2667 = vcmp.lt.s32.totalorder %v2645, 4
        %v2668 = vsel %vm2664, %v2648, %v2651
        %v2669 = vsel %vm2667, %v2657, 2102212464
        %v2670 = vsel %vm2666, %v2654, %v2669
        %v2671 = vsel %vm2665, %v2668, %v2670
        %v2672 = vsel %vm2664, %v2651, %v2654
        %v2673 = vsel %vm2667, %v2660, 920167782
        %v2674 = vsel %vm2666, %v2657, %v2673
        %v2675 = vsel %vm2665, %v2672, %v2674
        %v2676 = vsel %vm2664, %v2654, %v2657
        %v2677 = vsel %vm2667, %v2663, 1326507024
        %v2678 = vsel %vm2666, %v2660, %v2677
        %v2679 = vsel %vm2665, %v2676, %v2678
        %v2680 = vshll.u32 %v2640, 8
        %v2681 = vand.u32 %v2680, 65535
        %v2682 = vshrl.u32 %v2680, 16
        %v2683 = vand.u32 %v2679, 65535
        %v2684 = vshrl.u32 %v2679, 16
        %v2685 = vmul.u32 %v2681, %v2683
        %v2686 = vmul.u32 %v2681, %v2684
        %v2687 = vmul.u32 %v2682, %v2683
        %v2688 = vmul.u32 %v2682, %v2684
        %v2689 = vshll.u32 %v2686, 16
        %v2690 = vshrl.u32 %v2686, 16
        %v2691 = vshll.u32 %v2687, 16
        %v2692 = vshrl.u32 %v2687, 16
        %vm2693 = vc.u32 %v2685, %v2689
        %v2694 = vsel %vm2693, 1, 0
        %v2695 = vadd.s32 %v2685, %v2689
        %v2696 = vadd.s32 %v2688, %v2694
        %vm2697 = vc.u32 %v2695, %v2691
        %v2698 = vsel %vm2697, 1, 0
        %v2699 = vadd.s32 %v2695, %v2691
        %v2700 = vadd.s32 %v2696, %v2698
        %v2701 = vadd.s32 %v2700, %v2690
        %v2702 = vadd.s32 %v2701, %v2692
        %v2703 = vand.u32 %v2680, 65535
        %v2704 = vshrl.u32 %v2680, 16
        %v2705 = vand.u32 %v2675, 65535
        %v2706 = vshrl.u32 %v2675, 16
        %v2707 = vmul.u32 %v2703, %v2705
        %v2708 = vmul.u32 %v2703, %v2706
        %v2709 = vmul.u32 %v2704, %v2705
        %v2710 = vmul.u32 %v2704, %v2706
        %v2711 = vshll.u32 %v2708, 16
        %v2712 = vshrl.u32 %v2708, 16
        %v2713 = vshll.u32 %v2709, 16
        %v2714 = vshrl.u32 %v2709, 16
        %vm2715 = vc.u32 %v2707, %v2711
        %v2716 = vsel %vm2715, 1, 0
        %v2717 = vadd.s32 %v2707, %v2711
        %v2718 = vadd.s32 %v2710, %v2716
        %vm2719 = vc.u32 %v2717, %v2713
        %v2720 = vsel %vm2719, 1, 0
        %v2721 = vadd.s32 %v2717, %v2713
        %v2722 = vadd.s32 %v2718, %v2720
        %v2723 = vadd.s32 %v2722, %v2712
        %v2724 = vadd.s32 %v2723, %v2714
        %v2725 = vmul.u32 %v2680, %v2671
        %v2726 = vadd.s32 %v2702, %v2721
        %vm2727 = vc.u32 %v2702, %v2721
        %v2728 = vadd.s32 %v2724, 1
        %v2729 = vsel %vm2727, %v2728, %v2724
        %v2730 = vadd.s32 %v2725, %v2729
        %v2731 = vadd.s32 %v2730, 536870912
        %v2732 = vshrl.u32 %v2731, 30
        %v2733 = vshll.u32 %v2732, 30
        %v2734 = vsub.s32 %v2730, %v2733
        %vm2735 = vcmp.lt.s32.totalorder %v2734, 0
        %v2736 = vsub.s32 0, %v2734
        %v2737 = vsel %vm2735, %v2736, %v2734
        %v2738 = vclz %v2737
        %v2739 = vsub.s32 %v2738, 2
        %vm2740 = vcmp.gt.s32.totalorder 0, %v2739
        %v2741 = vsel %vm2740, 0, %v2739
        %v2742 = vsub.s32 32, %v2741
        %v2743 = vshll.u32 %v2734, %v2741
        %v2744 = vshrl.u32 %v2726, %v2742
        %v2745 = vor.u32 %v2743, %v2744
        %v2746 = vsub.s32 4294967266, %v2741
        %v2747 = vadd.s32 %v2746, 127
        %v2748 = vshll.u32 %v2747, 23
        %v2749 = vor.u32 4788187, %v2748
        %v2750 = vand.u32 2147483647, %v2749
        %v2752 = vcvt.s32.f32 %v2745
        %v2753 = vmul.f32 %v2752, %v2750
        %v2754 = vxor.u32 %v2753, 2147483648
        %v2755 = vsel %vm2634, %v2754, %v2753
        %v2756 = vsub.s32 4, %v2732
        %v2757 = vsel %vm2634, %v2756, %v2732
        %v2758 = vsel %vm2633, %v305, %v2755
        %v2759 = vsel %vm2633, 0, %v2757
        %v2760 = vmul.f32 %v2758, %v2758
        %v2761 = vmul.f32 %v2760, -0.001358992
        %v2762 = vadd.f32 %v2761, 0.041655596
        %v2763 = vmul.f32 %v2760, %v2762
        %v2764 = vadd.f32 %v2763, -0.4999988
        %v2765 = vmul.f32 %v2760, %v2764
        %v2766 = vadd.f32 1.0, %v2765
        %v2767 = vmul.f32 %v2758, %v2758
        %v2768 = vmul.f32 %v2767, -0.00019511016
        %v2769 = vadd.f32 %v2768, 0.008332121
        %v2770 = vmul.f32 %v2767, %v2769
        %v2771 = vadd.f32 %v2770, -0.16666654
        %v2772 = vmul.f32 %v2767, %v2771
        %v2773 = vadd.f32 %v2772, 1.0
        %v2774 = vmul.f32 %v2773, %v2758
        %vm2775 = vweird.f32 %v305
        %v2776 = vadd.s32 %v2759, 3
        %v2777 = vand.u32 %v2776, 3
        %vm2778 = vcmp.lt.s32.totalorder %v2777, 2
        %vm2779 = vcmp.eq.s32.totalorder %v2777, 0
        %v2780 = vxor.u32 %v2774, 2147483648
        %v2781 = vsel %vm2779, %v2766, %v2780
        %vm2782 = vcmp.eq.s32.totalorder %v2777, 2
        %v2783 = vxor.u32 %v2766, 2147483648
        %v2784 = vsel %vm2782, %v2783, %v2774
        %v2785 = vsel %vm2778, %v2781, %v2784
        %v2786 = vsel %vm2775, nan, %v2785
        %2787 = vst [vmem:[%s164] sm:$0xff] %v461
        %2788 = vst [vmem:[%s164 + $0x8] sm:$0xff] %v616
        %2789 = vst [vmem:[%s164 + $0x10] sm:$0xff] %v771
        %2790 = vst [vmem:[%s164 + $0x18] sm:$0xff] %v926
        %2791 = vst [vmem:[%s164 + $0x20] sm:$0xff] %v1081
        %2792 = vst [vmem:[%s164 + $0x28] sm:$0xff] %v1236
        %2793 = vst [vmem:[%s164 + $0x30] sm:$0xff] %v1391
        %2794 = vst [vmem:[%s164 + $0x38] sm:$0xff] %v1546
        %2795 = vst [vmem:[%s164 + $0x40] sm:$0xff] %v1701
        %2796 = vst [vmem:[%s164 + $0x48] sm:$0xff] %v1856
        %2797 = vst [vmem:[%s164 + $0x50] sm:$0xff] %v2011
        %2798 = vst [vmem:[%s164 + $0x58] sm:$0xff] %v2166
        %2799 = vst [vmem:[%s164 + $0x60] sm:$0xff] %v2321
        %2800 = vst [vmem:[%s164 + $0x68] sm:$0xff] %v2476
        %2801 = vst [vmem:[%s164 + $0x70] sm:$0xff] %v2631
        %2802 = vst [vmem:[%s164 + $0x78] sm:$0xff] %v2786
        %s2803 = sand.u32 %s93, 1
        %s2804 = scalar_lea.sflag [#allocation3], %s2803
        %s2805 = sand.u32 %s93, 1
        %s2806 = smul.addr %s2805, 128
        %s2807 = scalar_lea.vmem [#allocation2], %s2806
        // Predicated region
        $region33: #{tpu_custom_call.1} parent=31 // pred_check
          %p2808 = pneg %p103
        $region34: #{tpu_custom_call.1} parent=31 // pred_check_branch
          %2810 = sbr.rel (%p2808) target = $region36
        $region35: #{tpu_custom_call.1} parent=31 // pred_region
          %s2811 = smul.u32 16, %s17
          %2813 = vsyncadd %s2804, 0
          %s2814 = smul.addr %s2811, 8
          %s2815 = scalar_lea.hbm %s3, %s2814
          %s2816 = sshll.u32 %s2807, 4
          %s2817 = int_to_ptr.vmem [resolvable:$true] %s2816
          %s2818 = sshll.u32 %s2815, 4
          %s2819 = int_to_ptr.hbm [resolvable:$true] %s2818
          %2824 = dma.vmem_to_hbm [thread:$0]  %s2817, 2048, %s2819, %s2804, 128, 128, 8
        $region36: #{tpu_custom_call.1} parent=31 // pred_fallthru
          _
      $region32: #{tpu_custom_call.1} parent=5 // pred_fallthru
        _
      %p2825 = scmp.le.s32.totalorder 2, %s12
      // Predicated region
      $region37: #{tpu_custom_call.1} parent=5 // pred_check
        %p2826 = pneg %p2825
      $region38: #{tpu_custom_call.1} parent=5 // pred_check_branch
        %2828 = sbr.rel (%p2826) target = $region40
      $region39: #{tpu_custom_call.1} parent=5 // pred_region
        %s2829 = ssub.s32 %s12, 2
        // Predicated region
        $region41: #{tpu_custom_call.1} parent=39 // pred_check
          %p2830 = pneg %p109
        $region42: #{tpu_custom_call.1} parent=39 // pred_check_branch
          %2832 = sbr.rel (%p2830) target = $region44
        $region43: #{tpu_custom_call.1} parent=39 // pred_region
          %s2833 = sand.u32 %s94, 1
          %s2834 = scalar_lea.sflag [#allocation3], %s2833
          %s2835 = sand.u32 %s94, 1
          %s2836 = smul.addr %s2835, 128
          %s2837 = scalar_lea.vmem [#allocation2], %s2836
          %2839 = dma.done %s2834, 2048
        $region44: #{tpu_custom_call.1} parent=39 // pred_fallthru
          _
      $region40: #{tpu_custom_call.1} parent=5 // pred_fallthru
        _
    $region6: #{tpu_custom_call.1} parent=1 // loop_footer
      %s16 = sadd.s32 1, %s12
    $region7: #{tpu_custom_call.1} parent=1 // loop_footer_branch
      %11 = sbr.rel target = $region3
    $region8: #{tpu_custom_call.1} parent=1 // loop_exit
      _
    %2840 = vsyncpa [#allocation3], 1
    %s2841 = scalar_lea.sflag [#allocation3], 1
    %2842 = vsyncpa %s2841, 1

</llo_original>
